<compile_context>
chip_gen: v6e
topology: v6e:2x2x1
jax: 0.10.0
libtpu: 0.0.40
codegen_flags: <defaults>
</compile_context>

<pallas_src>
import functools

import jax
import jax.numpy as jnp
from jax.experimental import pallas as pl
from jax.experimental.pallas import tpu as pltpu

# PyTorch nn.LSTM gate order (i, f, g, o)


def _round_up(n, m):
    return ((n + m - 1) // m) * m


def _blob_layout(input_size, hidden_size, num_layers, output_size):
    """Row/lane layout of the single packed parameter blob."""
    H, L = hidden_size, num_layers
    H4 = 4 * H
    lanes = max(L * H4, output_size)
    r_w0 = 0                                 # [Fin, 4H]    W_ih_0^T
    r_b0 = input_size                        # [1,   4H]    b_ih_0 + b_hh_0
    r_wf = _round_up(input_size + 1, 8)      # [L*H, L*4H]  fused block matrix
    r_bf = r_wf + L * H                      # [1,   L*4H]  per-layer biases (block 0 = 0)
    r_fcw = _round_up(r_bf + 1, 8)           # [H,   OUT]   fc.weight^T
    r_fcb = r_fcw + H                        # [1,   OUT]   fc.bias
    rows = _round_up(r_fcb + 1, 8)
    return dict(rows=rows, lanes=lanes, r_w0=r_w0, r_b0=r_b0, r_wf=r_wf,
                r_bf=r_bf, r_fcw=r_fcw, r_fcb=r_fcb)


def _lstm_reg_kernel(x_ref, w_ref, out_ref, *, T, Bp, Fin, H, L, OUT,
                     r_w0, r_b0, r_wf, r_bf, r_fcw, r_fcb):
    """x_ref:  [T*Bp, Fin]  time-major, batch padded to Bp (multiple of 8)
       w_ref:  [rows, lanes] packed parameter blob (see _blob_layout)
       out_ref:[Bp, OUT]
    """
    H4 = 4 * H
    LH = L * H
    LH4 = L * H4

    # ---- hoisted layer-0 input projection for ALL timesteps: one matmul ----------
    w0 = w_ref[r_w0:r_w0 + Fin, 0:H4]                      # [Fin, 4H]  (live rows only)
    b0 = w_ref[r_b0:r_b0 + 1, 0:H4]                        # [1,   4H]
    xproj0 = jnp.dot(x_ref[...], w0,
                     preferred_element_type=jnp.float32) + b0   # [T*Bp, 4H]

    # ---- fused cross-layer recurrence weights (block matrix), hoisted ------------
    # col block l (layer l gates):  row block l   = W_hh_l^T
    #                               row block l-1 = W_ih_l^T (l > 0)
    wf = w_ref[r_wf:r_wf + LH, 0:LH4]                      # [L*H, L*4H]
    bf = jnp.broadcast_to(w_ref[r_bf:r_bf + 1, 0:LH4], (Bp, LH4))  # hoisted broadcast

    h = [jnp.zeros((Bp, H), jnp.float32) for _ in range(L)]   # diagonal h state
    c = [None] * L                                             # None == still zero

    # ---- wavefront over (layer, time): step s runs layer l at t = s - l ----------
    # critical path: T + L - 1 dependent matmul -> EUP -> VPU steps (not L*T)
    for s in range(T + L - 1):
        if s == 0:
            G = bf                                          # all h are zero at s == 0
        else:
            lhs = h[0] if L == 1 else jnp.concatenate(h, axis=1)   # [Bp, L*H]
            G = jnp.dot(lhs, wf, preferred_element_type=jnp.float32) + bf  # [Bp, L*4H]

        for l in range(L):                                  # static unroll; independent
            t = s - l
            if t < 0 or t >= T:
                continue
            g = G[:, l * H4:(l + 1) * H4]                   # aligned 128-lane tile
            if l == 0:
                g = g + xproj0[t * Bp:(t + 1) * Bp, :]      # aligned 8-sublane group
            # full-width nonlinearities: 1 sigmoid + 1 tanh per (layer, step)
            sig = jax.nn.sigmoid(g)                         # i | f | . | o
            tnh = jnp.tanh(g)                               # . | . | g | .
            gi = sig[:, 0:H]
            gf = sig[:, H:2 * H]
            gg = tnh[:, 2 * H:3 * H]
            go = sig[:, 3 * H:4 * H]
            c[l] = gi * gg if c[l] is None else gf * c[l] + gi * gg   # c0 == 0 exploited
            h[l] = go * jnp.tanh(c[l])

    # ---- fc on the last layer's final hidden state (out[:, -1, :] @ W^T + b) ------
    wfc = w_ref[r_fcw:r_fcw + H, 0:OUT]                     # [H, OUT]
    bfc = w_ref[r_fcb:r_fcb + 1, 0:OUT]                     # [1, OUT]
    out_ref[...] = jnp.dot(h[L - 1], wfc,
                           preferred_element_type=jnp.float32) + bfc


def init_params(key, input_size, hidden_size, num_layers, output_size):
    """Deterministic synthetic parameters matching nn.LSTM + nn.Linear shapes."""
    s = 0.1
    params = dict(w_ih=[], w_hh=[], b_ih=[], b_hh=[])
    for l in range(num_layers):
        in_l = input_size if l == 0 else hidden_size
        key, k0, k1, k2, k3 = jax.random.split(key, 5)
        params["w_ih"].append(s * jax.random.normal(k0, (4 * hidden_size, in_l), jnp.float32))
        params["w_hh"].append(s * jax.random.normal(k1, (4 * hidden_size, hidden_size), jnp.float32))
        params["b_ih"].append(s * jax.random.normal(k2, (4 * hidden_size,), jnp.float32))
        params["b_hh"].append(s * jax.random.normal(k3, (4 * hidden_size,), jnp.float32))
    key, kf0, kf1 = jax.random.split(key, 3)
    params["fc_w"] = s * jax.random.normal(kf0, (output_size, hidden_size), jnp.float32)
    params["fc_b"] = s * jax.random.normal(kf1, (output_size,), jnp.float32)
    return params


def pack_params(params, input_size, hidden_size, num_layers):
    """Pack every weight/bias into ONE lane-dense blob (single kernel parameter input)."""
    H, L = hidden_size, num_layers
    H4 = 4 * H
    OUT = params["fc_w"].shape[0]
    lay = _blob_layout(input_size, H, L, OUT)
    blob = jnp.zeros((lay["rows"], lay["lanes"]), jnp.float32)
    # layer-0 input projection + summed bias
    blob = blob.at[lay["r_w0"]:lay["r_w0"] + input_size, 0:H4].set(params["w_ih"][0].T)
    blob = blob.at[lay["r_b0"], 0:H4].set(params["b_ih"][0] + params["b_hh"][0])
    # fused cross-layer block matrix + biases (layer-0 bias already folded above)
    for l in range(L):
        r = lay["r_wf"]
        blob = blob.at[r + l * H: r + (l + 1) * H, l * H4:(l + 1) * H4].set(params["w_hh"][l].T)
        if l > 0:
            blob = blob.at[r + (l - 1) * H: r + l * H, l * H4:(l + 1) * H4].set(params["w_ih"][l].T)
            blob = blob.at[lay["r_bf"], l * H4:(l + 1) * H4].set(params["b_ih"][l] + params["b_hh"][l])
    # fc
    blob = blob.at[lay["r_fcw"]:lay["r_fcw"] + H, 0:OUT].set(params["fc_w"].T)
    blob = blob.at[lay["r_fcb"], 0:OUT].set(params["fc_b"])
    return blob


@functools.partial(jax.jit, static_argnames=("num_layers", "hidden_size", "output_size"))
def lstm_regression(x, w_blob, *, num_layers, hidden_size, output_size):
    B, T, Fin = x.shape
    Bp = max(8, _round_up(B, 8))          # pad batch to the (8,128) f32 sublane tile
    lay = _blob_layout(Fin, hidden_size, num_layers, output_size)

    # time-major + batch-padded flatten so each timestep is one aligned 8-row group
    xp = jnp.zeros((T, Bp, Fin), jnp.float32).at[:, :B, :].set(
        jnp.transpose(x.astype(jnp.float32), (1, 0, 2)))
    xf = xp.reshape(T * Bp, Fin)

    vmem = pl.BlockSpec(memory_space=pltpu.MemorySpace.VMEM)
    kernel = functools.partial(
        _lstm_reg_kernel, T=T, Bp=Bp, Fin=Fin, H=hidden_size, L=num_layers,
        OUT=output_size, r_w0=lay["r_w0"], r_b0=lay["r_b0"], r_wf=lay["r_wf"],
        r_bf=lay["r_bf"], r_fcw=lay["r_fcw"], r_fcb=lay["r_fcb"])

    out_p = pl.pallas_call(
        kernel,
        out_shape=jax.ShapeDtypeStruct((Bp, output_size), jnp.float32),
        in_specs=[vmem, vmem],            # only 2 inputs: sequence + packed params
        out_specs=vmem,
    )(xf, w_blob)
    return out_p[:B]


def _reference(x, params):
    """Pure-JAX reference (same math as nn.LSTM + fc on the last timestep)."""
    B, T, _ = x.shape
    H = params["w_hh"][0].shape[1]
    seq = x
    for l in range(len(params["w_ih"])):
        Wih, Whh = params["w_ih"][l], params["w_hh"][l]
        b = params["b_ih"][l] + params["b_hh"][l]
        h = jnp.zeros((B, H), jnp.float32)
        c = jnp.zeros((B, H), jnp.float32)
        outs = []
        for t in range(T):
            gates = seq[:, t, :] @ Wih.T + h @ Whh.T + b
            gi = jax.nn.sigmoid(gates[:, 0:H])
            gf = jax.nn.sigmoid(gates[:, H:2 * H])
            gg = jnp.tanh(gates[:, 2 * H:3 * H])
            go = jax.nn.sigmoid(gates[:, 3 * H:4 * H])
            c = gf * c + gi * gg
            h = go * jnp.tanh(c)
            outs.append(h)
        seq = jnp.stack(outs, axis=1)           # [B, T, H]
    return seq[:, -1, :] @ params["fc_w"].T + params["fc_b"]


if __name__ == "__main__":
    B, T = 2, 8                       # batch, sequence length
    input_size, hidden_size, num_layers, output_size = 4, 32, 2, 1

    key = jax.random.PRNGKey(0)
    k_x, k_p = jax.random.split(key)
    x = jax.random.normal(k_x, (B, T, input_size), jnp.float32)

    # edge_index / edge_weight are accepted by the PyTorch forward but never used;
    # built here only to mirror the call signature.
    src = jnp.arange(T, dtype=jnp.int32)
    edge_index = jnp.stack([src, (src + 1) % T])
    edge_weight = jnp.ones((T,), jnp.float32)
    del edge_index, edge_weight       # unused by the module's math

    params = init_params(k_p, input_size, hidden_size, num_layers, output_size)
    w_blob = pack_params(params, input_size, hidden_size, num_layers)

    out = lstm_regression(x, w_blob, num_layers=num_layers,
                          hidden_size=hidden_size, output_size=output_size)
    out = jax.block_until_ready(out)

    ref = _reference(x, params)
    assert out.shape == (B, output_size)
    assert bool(jnp.allclose(out, ref, atol=1e-4, rtol=1e-4)), \
        float(jnp.max(jnp.abs(out - ref)))
    print("KERNEL_OK")
</pallas_src>

<mosaic_0001>
module attributes {stable_mosaic.version = 11 : i64} {
  func.func @_lstm_reg_kernel(%arg0: memref<64x4xf32, #tpu.memory_space<vmem>>, %arg1: memref<120x256xf32, #tpu.memory_space<vmem>>, %arg2: memref<8x1xf32, #tpu.memory_space<vmem>>) attributes {dimension_semantics = [], scalar_prefetch = 0 : i64, scratch_operands = 0 : i64, tpu.core_type = #tpu.core_type<tc>} {
    %c0 = arith.constant 0 : index
    %c0_0 = arith.constant 0 : index
    %0 = vector.load %arg1[%c0, %c0_0] : memref<120x256xf32, #tpu.memory_space<vmem>>, vector<4x128xf32>
    %c4 = arith.constant 4 : index
    %c0_1 = arith.constant 0 : index
    %1 = vector.load %arg1[%c4, %c0_1] : memref<120x256xf32, #tpu.memory_space<vmem>>, vector<1x128xf32>
    %c0_2 = arith.constant 0 : index
    %c0_3 = arith.constant 0 : index
    %2 = vector.load %arg0[%c0_2, %c0_3] : memref<64x4xf32, #tpu.memory_space<vmem>>, vector<64x4xf32>
    %cst = arith.constant dense<0.000000e+00> : vector<64x128xf32>
    %3 = tpu.matmul %2, %0, %cst {dimension_numbers = #tpu.dot_dimension_numbers<[1], [0], [0], [1], [0, 0, 1, 1], [], []>} : vector<64x4xf32>, vector<4x128xf32>, vector<64x128xf32> -> vector<64x128xf32>
    %4 = vector.broadcast %1 : vector<1x128xf32> to vector<64x128xf32>
    %5 = arith.addf %3, %4 : vector<64x128xf32>
    %c8 = arith.constant 8 : index
    %c0_4 = arith.constant 0 : index
    %6 = vector.load %arg1[%c8, %c0_4] : memref<120x256xf32, #tpu.memory_space<vmem>>, vector<64x256xf32>
    %c72 = arith.constant 72 : index
    %c0_5 = arith.constant 0 : index
    %7 = vector.load %arg1[%c72, %c0_5] : memref<120x256xf32, #tpu.memory_space<vmem>>, vector<1x256xf32>
    %8 = vector.shape_cast %7 : vector<1x256xf32> to vector<1x256xf32>
    %9 = vector.broadcast %8 : vector<1x256xf32> to vector<8x256xf32>
    %cst_6 = arith.constant 0.000000e+00 : f32
    %10 = vector.broadcast %cst_6 : f32 to vector<8x32xf32>
    %11 = vector.extract_strided_slice %9 {offsets = [0, 0], sizes = [8, 128], strides = [1, 1]} : vector<8x256xf32> to vector<8x128xf32>
    %12 = vector.extract_strided_slice %5 {offsets = [0, 0], sizes = [8, 128], strides = [1, 1]} : vector<64x128xf32> to vector<8x128xf32>
    %13 = arith.addf %11, %12 : vector<8x128xf32>
    %14 = arith.negf %13 : vector<8x128xf32>
    %15 = math.exp %14 : vector<8x128xf32>
    %cst_7 = arith.constant 1.000000e+00 : f32
    %16 = vector.broadcast %cst_7 : f32 to vector<8x128xf32>
    %17 = arith.addf %16, %15 : vector<8x128xf32>
    %18 = arith.divf %16, %17 : vector<8x128xf32>
    %19 = math.tanh %13 : vector<8x128xf32>
    %20 = vector.extract_strided_slice %18 {offsets = [0, 0], sizes = [8, 32], strides = [1, 1]} : vector<8x128xf32> to vector<8x32xf32>
    %21 = vector.extract_strided_slice %19 {offsets = [0, 64], sizes = [8, 32], strides = [1, 1]} : vector<8x128xf32> to vector<8x32xf32>
    %22 = vector.extract_strided_slice %18 {offsets = [0, 96], sizes = [8, 32], strides = [1, 1]} : vector<8x128xf32> to vector<8x32xf32>
    %23 = arith.mulf %20, %21 : vector<8x32xf32>
    %24 = math.tanh %23 : vector<8x32xf32>
    %25 = arith.mulf %22, %24 : vector<8x32xf32>
    %26 = tpu.concatenate %25, %10 in 1 : vector<8x32xf32>, vector<8x32xf32> -> vector<8x64xf32>
    %cst_8 = arith.constant dense<0.000000e+00> : vector<8x256xf32>
    %27 = tpu.matmul %26, %6, %cst_8 {dimension_numbers = #tpu.dot_dimension_numbers<[1], [0], [0], [1], [0, 0, 1, 1], [], []>} : vector<8x64xf32>, vector<64x256xf32>, vector<8x256xf32> -> vector<8x256xf32>
    %28 = arith.addf %27, %9 : vector<8x256xf32>
    %29 = vector.extract_strided_slice %28 {offsets = [0, 0], sizes = [8, 128], strides = [1, 1]} : vector<8x256xf32> to vector<8x128xf32>
    %30 = vector.extract_strided_slice %5 {offsets = [8, 0], sizes = [8, 128], strides = [1, 1]} : vector<64x128xf32> to vector<8x128xf32>
    %31 = arith.addf %29, %30 : vector<8x128xf32>
    %32 = arith.negf %31 : vector<8x128xf32>
    %33 = math.exp %32 : vector<8x128xf32>
    %cst_9 = arith.constant 1.000000e+00 : f32
    %34 = vector.broadcast %cst_9 : f32 to vector<8x128xf32>
    %35 = arith.addf %34, %33 : vector<8x128xf32>
    %36 = arith.divf %34, %35 : vector<8x128xf32>
    %37 = math.tanh %31 : vector<8x128xf32>
    %38 = vector.extract_strided_slice %36 {offsets = [0, 0], sizes = [8, 32], strides = [1, 1]} : vector<8x128xf32> to vector<8x32xf32>
    %39 = vector.extract_strided_slice %36 {offsets = [0, 32], sizes = [8, 32], strides = [1, 1]} : vector<8x128xf32> to vector<8x32xf32>
    %40 = vector.extract_strided_slice %37 {offsets = [0, 64], sizes = [8, 32], strides = [1, 1]} : vector<8x128xf32> to vector<8x32xf32>
    %41 = vector.extract_strided_slice %36 {offsets = [0, 96], sizes = [8, 32], strides = [1, 1]} : vector<8x128xf32> to vector<8x32xf32>
    %42 = arith.mulf %39, %23 : vector<8x32xf32>
    %43 = arith.mulf %38, %40 : vector<8x32xf32>
    %44 = arith.addf %42, %43 : vector<8x32xf32>
    %45 = math.tanh %44 : vector<8x32xf32>
    %46 = arith.mulf %41, %45 : vector<8x32xf32>
    %47 = vector.extract_strided_slice %28 {offsets = [0, 128], sizes = [8, 128], strides = [1, 1]} : vector<8x256xf32> to vector<8x128xf32>
    %48 = arith.negf %47 : vector<8x128xf32>
    %49 = math.exp %48 : vector<8x128xf32>
    %cst_10 = arith.constant 1.000000e+00 : f32
    %50 = vector.broadcast %cst_10 : f32 to vector<8x128xf32>
    %51 = arith.addf %50, %49 : vector<8x128xf32>
    %52 = arith.divf %50, %51 : vector<8x128xf32>
    %53 = math.tanh %47 : vector<8x128xf32>
    %54 = vector.extract_strided_slice %52 {offsets = [0, 0], sizes = [8, 32], strides = [1, 1]} : vector<8x128xf32> to vector<8x32xf32>
    %55 = vector.extract_strided_slice %53 {offsets = [0, 64], sizes = [8, 32], strides = [1, 1]} : vector<8x128xf32> to vector<8x32xf32>
    %56 = vector.extract_strided_slice %52 {offsets = [0, 96], sizes = [8, 32], strides = [1, 1]} : vector<8x128xf32> to vector<8x32xf32>
    %57 = arith.mulf %54, %55 : vector<8x32xf32>
    %58 = math.tanh %57 : vector<8x32xf32>
    %59 = arith.mulf %56, %58 : vector<8x32xf32>
    %60 = tpu.concatenate %46, %59 in 1 : vector<8x32xf32>, vector<8x32xf32> -> vector<8x64xf32>
    %cst_11 = arith.constant dense<0.000000e+00> : vector<8x256xf32>
    %61 = tpu.matmul %60, %6, %cst_11 {dimension_numbers = #tpu.dot_dimension_numbers<[1], [0], [0], [1], [0, 0, 1, 1], [], []>} : vector<8x64xf32>, vector<64x256xf32>, vector<8x256xf32> -> vector<8x256xf32>
    %62 = arith.addf %61, %9 : vector<8x256xf32>
    %63 = vector.extract_strided_slice %62 {offsets = [0, 0], sizes = [8, 128], strides = [1, 1]} : vector<8x256xf32> to vector<8x128xf32>
    %64 = vector.extract_strided_slice %5 {offsets = [16, 0], sizes = [8, 128], strides = [1, 1]} : vector<64x128xf32> to vector<8x128xf32>
    %65 = arith.addf %63, %64 : vector<8x128xf32>
    %66 = arith.negf %65 : vector<8x128xf32>
    %67 = math.exp %66 : vector<8x128xf32>
    %cst_12 = arith.constant 1.000000e+00 : f32
    %68 = vector.broadcast %cst_12 : f32 to vector<8x128xf32>
    %69 = arith.addf %68, %67 : vector<8x128xf32>
    %70 = arith.divf %68, %69 : vector<8x128xf32>
    %71 = math.tanh %65 : vector<8x128xf32>
    %72 = vector.extract_strided_slice %70 {offsets = [0, 0], sizes = [8, 32], strides = [1, 1]} : vector<8x128xf32> to vector<8x32xf32>
    %73 = vector.extract_strided_slice %70 {offsets = [0, 32], sizes = [8, 32], strides = [1, 1]} : vector<8x128xf32> to vector<8x32xf32>
    %74 = vector.extract_strided_slice %71 {offsets = [0, 64], sizes = [8, 32], strides = [1, 1]} : vector<8x128xf32> to vector<8x32xf32>
    %75 = vector.extract_strided_slice %70 {offsets = [0, 96], sizes = [8, 32], strides = [1, 1]} : vector<8x128xf32> to vector<8x32xf32>
    %76 = arith.mulf %73, %44 : vector<8x32xf32>
    %77 = arith.mulf %72, %74 : vector<8x32xf32>
    %78 = arith.addf %76, %77 : vector<8x32xf32>
    %79 = math.tanh %78 : vector<8x32xf32>
    %80 = arith.mulf %75, %79 : vector<8x32xf32>
    %81 = vector.extract_strided_slice %62 {offsets = [0, 128], sizes = [8, 128], strides = [1, 1]} : vector<8x256xf32> to vector<8x128xf32>
    %82 = arith.negf %81 : vector<8x128xf32>
    %83 = math.exp %82 : vector<8x128xf32>
    %cst_13 = arith.constant 1.000000e+00 : f32
    %84 = vector.broadcast %cst_13 : f32 to vector<8x128xf32>
    %85 = arith.addf %84, %83 : vector<8x128xf32>
    %86 = arith.divf %84, %85 : vector<8x128xf32>
    %87 = math.tanh %81 : vector<8x128xf32>
    %88 = vector.extract_strided_slice %86 {offsets = [0, 0], sizes = [8, 32], strides = [1, 1]} : vector<8x128xf32> to vector<8x32xf32>
    %89 = vector.extract_strided_slice %86 {offsets = [0, 32], sizes = [8, 32], strides = [1, 1]} : vector<8x128xf32> to vector<8x32xf32>
    %90 = vector.extract_strided_slice %87 {offsets = [0, 64], sizes = [8, 32], strides = [1, 1]} : vector<8x128xf32> to vector<8x32xf32>
    %91 = vector.extract_strided_slice %86 {offsets = [0, 96], sizes = [8, 32], strides = [1, 1]} : vector<8x128xf32> to vector<8x32xf32>
    %92 = arith.mulf %89, %57 : vector<8x32xf32>
    %93 = arith.mulf %88, %90 : vector<8x32xf32>
    %94 = arith.addf %92, %93 : vector<8x32xf32>
    %95 = math.tanh %94 : vector<8x32xf32>
    %96 = arith.mulf %91, %95 : vector<8x32xf32>
    %97 = tpu.concatenate %80, %96 in 1 : vector<8x32xf32>, vector<8x32xf32> -> vector<8x64xf32>
    %cst_14 = arith.constant dense<0.000000e+00> : vector<8x256xf32>
    %98 = tpu.matmul %97, %6, %cst_14 {dimension_numbers = #tpu.dot_dimension_numbers<[1], [0], [0], [1], [0, 0, 1, 1], [], []>} : vector<8x64xf32>, vector<64x256xf32>, vector<8x256xf32> -> vector<8x256xf32>
    %99 = arith.addf %98, %9 : vector<8x256xf32>
    %100 = vector.extract_strided_slice %99 {offsets = [0, 0], sizes = [8, 128], strides = [1, 1]} : vector<8x256xf32> to vector<8x128xf32>
    %101 = vector.extract_strided_slice %5 {offsets = [24, 0], sizes = [8, 128], strides = [1, 1]} : vector<64x128xf32> to vector<8x128xf32>
    %102 = arith.addf %100, %101 : vector<8x128xf32>
    %103 = arith.negf %102 : vector<8x128xf32>
    %104 = math.exp %103 : vector<8x128xf32>
    %cst_15 = arith.constant 1.000000e+00 : f32
    %105 = vector.broadcast %cst_15 : f32 to vector<8x128xf32>
    %106 = arith.addf %105, %104 : vector<8x128xf32>
    %107 = arith.divf %105, %106 : vector<8x128xf32>
    %108 = math.tanh %102 : vector<8x128xf32>
    %109 = vector.extract_strided_slice %107 {offsets = [0, 0], sizes = [8, 32], strides = [1, 1]} : vector<8x128xf32> to vector<8x32xf32>
    %110 = vector.extract_strided_slice %107 {offsets = [0, 32], sizes = [8, 32], strides = [1, 1]} : vector<8x128xf32> to vector<8x32xf32>
    %111 = vector.extract_strided_slice %108 {offsets = [0, 64], sizes = [8, 32], strides = [1, 1]} : vector<8x128xf32> to vector<8x32xf32>
    %112 = vector.extract_strided_slice %107 {offsets = [0, 96], sizes = [8, 32], strides = [1, 1]} : vector<8x128xf32> to vector<8x32xf32>
    %113 = arith.mulf %110, %78 : vector<8x32xf32>
    %114 = arith.mulf %109, %111 : vector<8x32xf32>
    %115 = arith.addf %113, %114 : vector<8x32xf32>
    %116 = math.tanh %115 : vector<8x32xf32>
    %117 = arith.mulf %112, %116 : vector<8x32xf32>
    %118 = vector.extract_strided_slice %99 {offsets = [0, 128], sizes = [8, 128], strides = [1, 1]} : vector<8x256xf32> to vector<8x128xf32>
    %119 = arith.negf %118 : vector<8x128xf32>
    %120 = math.exp %119 : vector<8x128xf32>
    %cst_16 = arith.constant 1.000000e+00 : f32
    %121 = vector.broadcast %cst_16 : f32 to vector<8x128xf32>
    %122 = arith.addf %121, %120 : vector<8x128xf32>
    %123 = arith.divf %121, %122 : vector<8x128xf32>
    %124 = math.tanh %118 : vector<8x128xf32>
    %125 = vector.extract_strided_slice %123 {offsets = [0, 0], sizes = [8, 32], strides = [1, 1]} : vector<8x128xf32> to vector<8x32xf32>
    %126 = vector.extract_strided_slice %123 {offsets = [0, 32], sizes = [8, 32], strides = [1, 1]} : vector<8x128xf32> to vector<8x32xf32>
    %127 = vector.extract_strided_slice %124 {offsets = [0, 64], sizes = [8, 32], strides = [1, 1]} : vector<8x128xf32> to vector<8x32xf32>
    %128 = vector.extract_strided_slice %123 {offsets = [0, 96], sizes = [8, 32], strides = [1, 1]} : vector<8x128xf32> to vector<8x32xf32>
    %129 = arith.mulf %126, %94 : vector<8x32xf32>
    %130 = arith.mulf %125, %127 : vector<8x32xf32>
    %131 = arith.addf %129, %130 : vector<8x32xf32>
    %132 = math.tanh %131 : vector<8x32xf32>
    %133 = arith.mulf %128, %132 : vector<8x32xf32>
    %134 = tpu.concatenate %117, %133 in 1 : vector<8x32xf32>, vector<8x32xf32> -> vector<8x64xf32>
    %cst_17 = arith.constant dense<0.000000e+00> : vector<8x256xf32>
    %135 = tpu.matmul %134, %6, %cst_17 {dimension_numbers = #tpu.dot_dimension_numbers<[1], [0], [0], [1], [0, 0, 1, 1], [], []>} : vector<8x64xf32>, vector<64x256xf32>, vector<8x256xf32> -> vector<8x256xf32>
    %136 = arith.addf %135, %9 : vector<8x256xf32>
    %137 = vector.extract_strided_slice %136 {offsets = [0, 0], sizes = [8, 128], strides = [1, 1]} : vector<8x256xf32> to vector<8x128xf32>
    %138 = vector.extract_strided_slice %5 {offsets = [32, 0], sizes = [8, 128], strides = [1, 1]} : vector<64x128xf32> to vector<8x128xf32>
    %139 = arith.addf %137, %138 : vector<8x128xf32>
    %140 = arith.negf %139 : vector<8x128xf32>
    %141 = math.exp %140 : vector<8x128xf32>
    %cst_18 = arith.constant 1.000000e+00 : f32
    %142 = vector.broadcast %cst_18 : f32 to vector<8x128xf32>
    %143 = arith.addf %142, %141 : vector<8x128xf32>
    %144 = arith.divf %142, %143 : vector<8x128xf32>
    %145 = math.tanh %139 : vector<8x128xf32>
    %146 = vector.extract_strided_slice %144 {offsets = [0, 0], sizes = [8, 32], strides = [1, 1]} : vector<8x128xf32> to vector<8x32xf32>
    %147 = vector.extract_strided_slice %144 {offsets = [0, 32], sizes = [8, 32], strides = [1, 1]} : vector<8x128xf32> to vector<8x32xf32>
    %148 = vector.extract_strided_slice %145 {offsets = [0, 64], sizes = [8, 32], strides = [1, 1]} : vector<8x128xf32> to vector<8x32xf32>
    %149 = vector.extract_strided_slice %144 {offsets = [0, 96], sizes = [8, 32], strides = [1, 1]} : vector<8x128xf32> to vector<8x32xf32>
    %150 = arith.mulf %147, %115 : vector<8x32xf32>
    %151 = arith.mulf %146, %148 : vector<8x32xf32>
    %152 = arith.addf %150, %151 : vector<8x32xf32>
    %153 = math.tanh %152 : vector<8x32xf32>
    %154 = arith.mulf %149, %153 : vector<8x32xf32>
    %155 = vector.extract_strided_slice %136 {offsets = [0, 128], sizes = [8, 128], strides = [1, 1]} : vector<8x256xf32> to vector<8x128xf32>
    %156 = arith.negf %155 : vector<8x128xf32>
    %157 = math.exp %156 : vector<8x128xf32>
    %cst_19 = arith.constant 1.000000e+00 : f32
    %158 = vector.broadcast %cst_19 : f32 to vector<8x128xf32>
    %159 = arith.addf %158, %157 : vector<8x128xf32>
    %160 = arith.divf %158, %159 : vector<8x128xf32>
    %161 = math.tanh %155 : vector<8x128xf32>
    %162 = vector.extract_strided_slice %160 {offsets = [0, 0], sizes = [8, 32], strides = [1, 1]} : vector<8x128xf32> to vector<8x32xf32>
    %163 = vector.extract_strided_slice %160 {offsets = [0, 32], sizes = [8, 32], strides = [1, 1]} : vector<8x128xf32> to vector<8x32xf32>
    %164 = vector.extract_strided_slice %161 {offsets = [0, 64], sizes = [8, 32], strides = [1, 1]} : vector<8x128xf32> to vector<8x32xf32>
    %165 = vector.extract_strided_slice %160 {offsets = [0, 96], sizes = [8, 32], strides = [1, 1]} : vector<8x128xf32> to vector<8x32xf32>
    %166 = arith.mulf %163, %131 : vector<8x32xf32>
    %167 = arith.mulf %162, %164 : vector<8x32xf32>
    %168 = arith.addf %166, %167 : vector<8x32xf32>
    %169 = math.tanh %168 : vector<8x32xf32>
    %170 = arith.mulf %165, %169 : vector<8x32xf32>
    %171 = tpu.concatenate %154, %170 in 1 : vector<8x32xf32>, vector<8x32xf32> -> vector<8x64xf32>
    %cst_20 = arith.constant dense<0.000000e+00> : vector<8x256xf32>
    %172 = tpu.matmul %171, %6, %cst_20 {dimension_numbers = #tpu.dot_dimension_numbers<[1], [0], [0], [1], [0, 0, 1, 1], [], []>} : vector<8x64xf32>, vector<64x256xf32>, vector<8x256xf32> -> vector<8x256xf32>
    %173 = arith.addf %172, %9 : vector<8x256xf32>
    %174 = vector.extract_strided_slice %173 {offsets = [0, 0], sizes = [8, 128], strides = [1, 1]} : vector<8x256xf32> to vector<8x128xf32>
    %175 = vector.extract_strided_slice %5 {offsets = [40, 0], sizes = [8, 128], strides = [1, 1]} : vector<64x128xf32> to vector<8x128xf32>
    %176 = arith.addf %174, %175 : vector<8x128xf32>
    %177 = arith.negf %176 : vector<8x128xf32>
    %178 = math.exp %177 : vector<8x128xf32>
    %cst_21 = arith.constant 1.000000e+00 : f32
    %179 = vector.broadcast %cst_21 : f32 to vector<8x128xf32>
    %180 = arith.addf %179, %178 : vector<8x128xf32>
    %181 = arith.divf %179, %180 : vector<8x128xf32>
    %182 = math.tanh %176 : vector<8x128xf32>
    %183 = vector.extract_strided_slice %181 {offsets = [0, 0], sizes = [8, 32], strides = [1, 1]} : vector<8x128xf32> to vector<8x32xf32>
    %184 = vector.extract_strided_slice %181 {offsets = [0, 32], sizes = [8, 32], strides = [1, 1]} : vector<8x128xf32> to vector<8x32xf32>
    %185 = vector.extract_strided_slice %182 {offsets = [0, 64], sizes = [8, 32], strides = [1, 1]} : vector<8x128xf32> to vector<8x32xf32>
    %186 = vector.extract_strided_slice %181 {offsets = [0, 96], sizes = [8, 32], strides = [1, 1]} : vector<8x128xf32> to vector<8x32xf32>
    %187 = arith.mulf %184, %152 : vector<8x32xf32>
    %188 = arith.mulf %183, %185 : vector<8x32xf32>
    %189 = arith.addf %187, %188 : vector<8x32xf32>
    %190 = math.tanh %189 : vector<8x32xf32>
    %191 = arith.mulf %186, %190 : vector<8x32xf32>
    %192 = vector.extract_strided_slice %173 {offsets = [0, 128], sizes = [8, 128], strides = [1, 1]} : vector<8x256xf32> to vector<8x128xf32>
    %193 = arith.negf %192 : vector<8x128xf32>
    %194 = math.exp %193 : vector<8x128xf32>
    %cst_22 = arith.constant 1.000000e+00 : f32
    %195 = vector.broadcast %cst_22 : f32 to vector<8x128xf32>
    %196 = arith.addf %195, %194 : vector<8x128xf32>
    %197 = arith.divf %195, %196 : vector<8x128xf32>
    %198 = math.tanh %192 : vector<8x128xf32>
    %199 = vector.extract_strided_slice %197 {offsets = [0, 0], sizes = [8, 32], strides = [1, 1]} : vector<8x128xf32> to vector<8x32xf32>
    %200 = vector.extract_strided_slice %197 {offsets = [0, 32], sizes = [8, 32], strides = [1, 1]} : vector<8x128xf32> to vector<8x32xf32>
    %201 = vector.extract_strided_slice %198 {offsets = [0, 64], sizes = [8, 32], strides = [1, 1]} : vector<8x128xf32> to vector<8x32xf32>
    %202 = vector.extract_strided_slice %197 {offsets = [0, 96], sizes = [8, 32], strides = [1, 1]} : vector<8x128xf32> to vector<8x32xf32>
    %203 = arith.mulf %200, %168 : vector<8x32xf32>
    %204 = arith.mulf %199, %201 : vector<8x32xf32>
    %205 = arith.addf %203, %204 : vector<8x32xf32>
    %206 = math.tanh %205 : vector<8x32xf32>
    %207 = arith.mulf %202, %206 : vector<8x32xf32>
    %208 = tpu.concatenate %191, %207 in 1 : vector<8x32xf32>, vector<8x32xf32> -> vector<8x64xf32>
    %cst_23 = arith.constant dense<0.000000e+00> : vector<8x256xf32>
    %209 = tpu.matmul %208, %6, %cst_23 {dimension_numbers = #tpu.dot_dimension_numbers<[1], [0], [0], [1], [0, 0, 1, 1], [], []>} : vector<8x64xf32>, vector<64x256xf32>, vector<8x256xf32> -> vector<8x256xf32>
    %210 = arith.addf %209, %9 : vector<8x256xf32>
    %211 = vector.extract_strided_slice %210 {offsets = [0, 0], sizes = [8, 128], strides = [1, 1]} : vector<8x256xf32> to vector<8x128xf32>
    %212 = vector.extract_strided_slice %5 {offsets = [48, 0], sizes = [8, 128], strides = [1, 1]} : vector<64x128xf32> to vector<8x128xf32>
    %213 = arith.addf %211, %212 : vector<8x128xf32>
    %214 = arith.negf %213 : vector<8x128xf32>
    %215 = math.exp %214 : vector<8x128xf32>
    %cst_24 = arith.constant 1.000000e+00 : f32
    %216 = vector.broadcast %cst_24 : f32 to vector<8x128xf32>
    %217 = arith.addf %216, %215 : vector<8x128xf32>
    %218 = arith.divf %216, %217 : vector<8x128xf32>
    %219 = math.tanh %213 : vector<8x128xf32>
    %220 = vector.extract_strided_slice %218 {offsets = [0, 0], sizes = [8, 32], strides = [1, 1]} : vector<8x128xf32> to vector<8x32xf32>
    %221 = vector.extract_strided_slice %218 {offsets = [0, 32], sizes = [8, 32], strides = [1, 1]} : vector<8x128xf32> to vector<8x32xf32>
    %222 = vector.extract_strided_slice %219 {offsets = [0, 64], sizes = [8, 32], strides = [1, 1]} : vector<8x128xf32> to vector<8x32xf32>
    %223 = vector.extract_strided_slice %218 {offsets = [0, 96], sizes = [8, 32], strides = [1, 1]} : vector<8x128xf32> to vector<8x32xf32>
    %224 = arith.mulf %221, %189 : vector<8x32xf32>
    %225 = arith.mulf %220, %222 : vector<8x32xf32>
    %226 = arith.addf %224, %225 : vector<8x32xf32>
    %227 = math.tanh %226 : vector<8x32xf32>
    %228 = arith.mulf %223, %227 : vector<8x32xf32>
    %229 = vector.extract_strided_slice %210 {offsets = [0, 128], sizes = [8, 128], strides = [1, 1]} : vector<8x256xf32> to vector<8x128xf32>
    %230 = arith.negf %229 : vector<8x128xf32>
    %231 = math.exp %230 : vector<8x128xf32>
    %cst_25 = arith.constant 1.000000e+00 : f32
    %232 = vector.broadcast %cst_25 : f32 to vector<8x128xf32>
    %233 = arith.addf %232, %231 : vector<8x128xf32>
    %234 = arith.divf %232, %233 : vector<8x128xf32>
    %235 = math.tanh %229 : vector<8x128xf32>
    %236 = vector.extract_strided_slice %234 {offsets = [0, 0], sizes = [8, 32], strides = [1, 1]} : vector<8x128xf32> to vector<8x32xf32>
    %237 = vector.extract_strided_slice %234 {offsets = [0, 32], sizes = [8, 32], strides = [1, 1]} : vector<8x128xf32> to vector<8x32xf32>
    %238 = vector.extract_strided_slice %235 {offsets = [0, 64], sizes = [8, 32], strides = [1, 1]} : vector<8x128xf32> to vector<8x32xf32>
    %239 = vector.extract_strided_slice %234 {offsets = [0, 96], sizes = [8, 32], strides = [1, 1]} : vector<8x128xf32> to vector<8x32xf32>
    %240 = arith.mulf %237, %205 : vector<8x32xf32>
    %241 = arith.mulf %236, %238 : vector<8x32xf32>
    %242 = arith.addf %240, %241 : vector<8x32xf32>
    %243 = math.tanh %242 : vector<8x32xf32>
    %244 = arith.mulf %239, %243 : vector<8x32xf32>
    %245 = tpu.concatenate %228, %244 in 1 : vector<8x32xf32>, vector<8x32xf32> -> vector<8x64xf32>
    %cst_26 = arith.constant dense<0.000000e+00> : vector<8x256xf32>
    %246 = tpu.matmul %245, %6, %cst_26 {dimension_numbers = #tpu.dot_dimension_numbers<[1], [0], [0], [1], [0, 0, 1, 1], [], []>} : vector<8x64xf32>, vector<64x256xf32>, vector<8x256xf32> -> vector<8x256xf32>
    %247 = arith.addf %246, %9 : vector<8x256xf32>
    %248 = vector.extract_strided_slice %247 {offsets = [0, 0], sizes = [8, 128], strides = [1, 1]} : vector<8x256xf32> to vector<8x128xf32>
    %249 = vector.extract_strided_slice %5 {offsets = [56, 0], sizes = [8, 128], strides = [1, 1]} : vector<64x128xf32> to vector<8x128xf32>
    %250 = arith.addf %248, %249 : vector<8x128xf32>
    %251 = arith.negf %250 : vector<8x128xf32>
    %252 = math.exp %251 : vector<8x128xf32>
    %cst_27 = arith.constant 1.000000e+00 : f32
    %253 = vector.broadcast %cst_27 : f32 to vector<8x128xf32>
    %254 = arith.addf %253, %252 : vector<8x128xf32>
    %255 = arith.divf %253, %254 : vector<8x128xf32>
    %256 = math.tanh %250 : vector<8x128xf32>
    %257 = vector.extract_strided_slice %255 {offsets = [0, 0], sizes = [8, 32], strides = [1, 1]} : vector<8x128xf32> to vector<8x32xf32>
    %258 = vector.extract_strided_slice %255 {offsets = [0, 32], sizes = [8, 32], strides = [1, 1]} : vector<8x128xf32> to vector<8x32xf32>
    %259 = vector.extract_strided_slice %256 {offsets = [0, 64], sizes = [8, 32], strides = [1, 1]} : vector<8x128xf32> to vector<8x32xf32>
    %260 = vector.extract_strided_slice %255 {offsets = [0, 96], sizes = [8, 32], strides = [1, 1]} : vector<8x128xf32> to vector<8x32xf32>
    %261 = arith.mulf %258, %226 : vector<8x32xf32>
    %262 = arith.mulf %257, %259 : vector<8x32xf32>
    %263 = arith.addf %261, %262 : vector<8x32xf32>
    %264 = math.tanh %263 : vector<8x32xf32>
    %265 = arith.mulf %260, %264 : vector<8x32xf32>
    %266 = vector.extract_strided_slice %247 {offsets = [0, 128], sizes = [8, 128], strides = [1, 1]} : vector<8x256xf32> to vector<8x128xf32>
    %267 = arith.negf %266 : vector<8x128xf32>
    %268 = math.exp %267 : vector<8x128xf32>
    %cst_28 = arith.constant 1.000000e+00 : f32
    %269 = vector.broadcast %cst_28 : f32 to vector<8x128xf32>
    %270 = arith.addf %269, %268 : vector<8x128xf32>
    %271 = arith.divf %269, %270 : vector<8x128xf32>
    %272 = math.tanh %266 : vector<8x128xf32>
    %273 = vector.extract_strided_slice %271 {offsets = [0, 0], sizes = [8, 32], strides = [1, 1]} : vector<8x128xf32> to vector<8x32xf32>
    %274 = vector.extract_strided_slice %271 {offsets = [0, 32], sizes = [8, 32], strides = [1, 1]} : vector<8x128xf32> to vector<8x32xf32>
    %275 = vector.extract_strided_slice %272 {offsets = [0, 64], sizes = [8, 32], strides = [1, 1]} : vector<8x128xf32> to vector<8x32xf32>
    %276 = vector.extract_strided_slice %271 {offsets = [0, 96], sizes = [8, 32], strides = [1, 1]} : vector<8x128xf32> to vector<8x32xf32>
    %277 = arith.mulf %274, %242 : vector<8x32xf32>
    %278 = arith.mulf %273, %275 : vector<8x32xf32>
    %279 = arith.addf %277, %278 : vector<8x32xf32>
    %280 = math.tanh %279 : vector<8x32xf32>
    %281 = arith.mulf %276, %280 : vector<8x32xf32>
    %282 = tpu.concatenate %265, %281 in 1 : vector<8x32xf32>, vector<8x32xf32> -> vector<8x64xf32>
    %cst_29 = arith.constant dense<0.000000e+00> : vector<8x256xf32>
    %283 = tpu.matmul %282, %6, %cst_29 {dimension_numbers = #tpu.dot_dimension_numbers<[1], [0], [0], [1], [0, 0, 1, 1], [], []>} : vector<8x64xf32>, vector<64x256xf32>, vector<8x256xf32> -> vector<8x256xf32>
    %284 = arith.addf %283, %9 : vector<8x256xf32>
    %285 = vector.extract_strided_slice %284 {offsets = [0, 128], sizes = [8, 128], strides = [1, 1]} : vector<8x256xf32> to vector<8x128xf32>
    %286 = arith.negf %285 : vector<8x128xf32>
    %287 = math.exp %286 : vector<8x128xf32>
    %cst_30 = arith.constant 1.000000e+00 : f32
    %288 = vector.broadcast %cst_30 : f32 to vector<8x128xf32>
    %289 = arith.addf %288, %287 : vector<8x128xf32>
    %290 = arith.divf %288, %289 : vector<8x128xf32>
    %291 = math.tanh %285 : vector<8x128xf32>
    %292 = vector.extract_strided_slice %290 {offsets = [0, 0], sizes = [8, 32], strides = [1, 1]} : vector<8x128xf32> to vector<8x32xf32>
    %293 = vector.extract_strided_slice %290 {offsets = [0, 32], sizes = [8, 32], strides = [1, 1]} : vector<8x128xf32> to vector<8x32xf32>
    %294 = vector.extract_strided_slice %291 {offsets = [0, 64], sizes = [8, 32], strides = [1, 1]} : vector<8x128xf32> to vector<8x32xf32>
    %295 = vector.extract_strided_slice %290 {offsets = [0, 96], sizes = [8, 32], strides = [1, 1]} : vector<8x128xf32> to vector<8x32xf32>
    %296 = arith.mulf %293, %279 : vector<8x32xf32>
    %297 = arith.mulf %292, %294 : vector<8x32xf32>
    %298 = arith.addf %296, %297 : vector<8x32xf32>
    %299 = math.tanh %298 : vector<8x32xf32>
    %300 = arith.mulf %295, %299 : vector<8x32xf32>
    %c80 = arith.constant 80 : index
    %c0_31 = arith.constant 0 : index
    %301 = vector.load %arg1[%c80, %c0_31] : memref<120x256xf32, #tpu.memory_space<vmem>>, vector<32x1xf32>
    %c112 = arith.constant 112 : index
    %c0_32 = arith.constant 0 : index
    %302 = vector.load %arg1[%c112, %c0_32] : memref<120x256xf32, #tpu.memory_space<vmem>>, vector<1x1xf32>
    %cst_33 = arith.constant dense<0.000000e+00> : vector<8x1xf32>
    %303 = tpu.matmul %300, %301, %cst_33 {dimension_numbers = #tpu.dot_dimension_numbers<[1], [0], [0], [1], [0, 0, 1, 1], [], []>} : vector<8x32xf32>, vector<32x1xf32>, vector<8x1xf32> -> vector<8x1xf32>
    %304 = vector.broadcast %302 : vector<1x1xf32> to vector<8x1xf32>
    %305 = arith.addf %303, %304 : vector<8x1xf32>
    %c0_34 = arith.constant 0 : index
    %c0_35 = arith.constant 0 : index
    %306 = vector.load %arg2[%c0_34, %c0_35] : memref<8x1xf32, #tpu.memory_space<vmem>>, vector<8x1xf32>
    tpu.vector_store %arg2[%c0_34, %c0_35], %305 {strides = array<i32>} : memref<8x1xf32, #tpu.memory_space<vmem>>, vector<8x1xf32>,
    return
  }
}

</mosaic_0001>

<llo_original>
// kernel: lstm_regression.1
$region0: #{lstm_regression.1}
  #allocation0 [shape = 'u32[]', space=smem, size = 0x4, offset = 0x4, fixed_abs, tag = 'smem constant byte address 0x4 - core index']
  #allocation1 [shape = 'u32[144,128]{1,0:T(1,128)}', space=vmem, size = 0x12000, scoped, tag = 'internal scratch']
  %s0 = inlined_call_operand.vmem [shape: f32[64,4], index: 0, kind: input, shape index: {}]
  %s1 = inlined_call_operand.hbm [shape: f32[120,256], index: 1, kind: input, shape index: {}]
  %s2 = inlined_call_operand.vmem [shape: f32[8,1], index: 2, kind: output, shape index: {}]
  %s3 = sld [smem:[#allocation0]]
  $region22: #{lstm_regression.1} parent=0
    _
  %s5 = ssub.s32 1, %s3
  %s6 = scalar_select 0, %s5, %s3
  $region1: #{lstm_regression.1} parent=0
    #allocation2 [shape = 'u8[122880]{0}', space=vmem, size = 0x1e000, scoped, tag = 'input window, operand 1, single buffered']
    #allocation3 [shape = 's32[1]{0}', space=sflag, size = 0x4, scoped, tag = 'scoped memory for lstm_regression.1']
    %7 = vsyncpa [#allocation3], 0
    // Predicated region
    $region2: #{lstm_regression.1} parent=1 // pred_check
      _
    $region3: #{lstm_regression.1} parent=1 // pred_check_branch
      %9 = sbr.rel (0) target = $region5
    $region4: #{lstm_regression.1} parent=1 // pred_region
      _
    $region5: #{lstm_regression.1} parent=1 // pred_fallthru
      _
    // Predicated region
    $region6: #{lstm_regression.1} parent=1 // pred_check
      _
    $region7: #{lstm_regression.1} parent=1 // pred_check_branch
      %11 = sbr.rel (0) target = $region9
    $region8: #{lstm_regression.1} parent=1 // pred_region
      %s13 = ssub.s32 3840, 3840
      %14 = vsyncadd [#allocation3], %s13
      %s15 = sshll.u32 [#allocation2], 4
      %s16 = int_to_ptr.vmem [resolvable:$true] %s15
      %21 = dma.hbm_to_vmem [thread:$0]  %s1, 3840, %s16, [#allocation3], 256, 256, 16
    $region9: #{lstm_regression.1} parent=1 // pred_fallthru
      _
    // Predicated region
    $region10: #{lstm_regression.1} parent=1 // pred_check
      _
    $region11: #{lstm_regression.1} parent=1 // pred_check_branch
      %23 = sbr.rel (0) target = $region13
    $region12: #{lstm_regression.1} parent=1 // pred_region
      %24 = dma.done [#allocation3], 3840
    $region13: #{lstm_regression.1} parent=1 // pred_fallthru
      _
    %v25 = vld [vmem:[#allocation2] sm:$0xf]
    %v26 = vld [vmem:[#allocation2 + $0x4] ss:$0 sm:$0xff]
    %v27 = vld [vmem:[%s0] sm:$0xff]
    %v28 = vld [vmem:[%s0 + $0x8] sm:$0xff]
    %v29 = vld [vmem:[%s0 + $0x10] sm:$0xff]
    %v30 = vld [vmem:[%s0 + $0x18] sm:$0xff]
    %v31 = vld [vmem:[%s0 + $0x20] sm:$0xff]
    %v32 = vld [vmem:[%s0 + $0x28] sm:$0xff]
    %v33 = vld [vmem:[%s0 + $0x30] sm:$0xff]
    %v34 = vld [vmem:[%s0 + $0x38] sm:$0xff]
    %vm35 = vcmask 31744
    %v37 = vsel %vm35, %v27, 0
    %v40 = vsel %vm35, %v28, 0
    %v43 = vsel %vm35, %v29, 0
    %v46 = vsel %vm35, %v30, 0
    %v49 = vsel %vm35, %v31, 0
    %v52 = vsel %vm35, %v32, 0
    %v55 = vsel %vm35, %v33, 0
    %v58 = vsel %vm35, %v34, 0
    %vm60 = vcmask 1043456
    %v62 = vsel %vm60, %v25, 0
    %64 = vmatprep.subr.mxu0 0.0
    %65 = vmatpush1.msra.mxu0 0.0
    %66 = vmatprep.subr.mxu0 0.0
    %67 = vmatpush1.msra.mxu0 0.0
    %68 = vmatprep.subr.mxu0 0.0
    %69 = vmatpush1.msra.mxu0 0.0
    %70 = vmatprep.subr.mxu0 0.0
    %71 = vmatpush1.msra.mxu0 0.0
    %72 = vmatprep.subr.mxu0 0.0
    %73 = vmatpush1.msra.mxu0 0.0
    %74 = vmatprep.subr.mxu0 0.0
    %75 = vmatpush1.msra.mxu0 0.0
    %76 = vmatprep.subr.mxu0 0.0
    %77 = vmatpush1.msra.mxu0 0.0
    %78 = vmatprep.subr.mxu0 0.0
    %79 = vmatpush1.msra.mxu0 0.0
    %80 = vmatprep.subr.mxu0 0.0
    %81 = vmatpush1.msra.mxu0 0.0
    %82 = vmatprep.subr.mxu0 0.0
    %83 = vmatpush1.msra.mxu0 0.0
    %84 = vmatprep.subr.mxu0 0.0
    %85 = vmatpush1.msra.mxu0 0.0
    %86 = vmatprep.subr.mxu0 0.0
    %87 = vmatpush1.msra.mxu0 0.0
    %88 = vmatprep.subr.mxu0 0.0
    %89 = vmatpush1.msra.mxu0 0.0
    %90 = vmatprep.subr.mxu0 0.0
    %91 = vmatpush1.msra.mxu0 0.0
    %92 = vmatprep.subr.mxu0 0.0
    %93 = vmatpush1.msra.mxu0 0.0
    %94 = vmatprep.subr.mxu0 0.0
    %95 = vmatpush1.msra.mxu0 %v62
    %96 = vmatprep.subr.mxu0 0.0
    %97 = vmatpush2.msra.mxu0 0.0
    %98 = vmatprep.subr.mxu0 0.0
    %99 = vmatpush2.msra.mxu0 0.0
    %100 = vmatprep.subr.mxu0 0.0
    %101 = vmatpush2.msra.mxu0 0.0
    %102 = vmatprep.subr.mxu0 0.0
    %103 = vmatpush2.msra.mxu0 0.0
    %104 = vmatprep.subr.mxu0 0.0
    %105 = vmatpush2.msra.mxu0 0.0
    %106 = vmatprep.subr.mxu0 0.0
    %107 = vmatpush2.msra.mxu0 0.0
    %108 = vmatprep.subr.mxu0 0.0
    %109 = vmatpush2.msra.mxu0 0.0
    %110 = vmatprep.subr.mxu0 0.0
    %111 = vmatpush2.msra.mxu0 0.0
    %112 = vmatprep.subr.mxu0 0.0
    %113 = vmatpush2.msra.mxu0 0.0
    %114 = vmatprep.subr.mxu0 0.0
    %115 = vmatpush2.msra.mxu0 0.0
    %116 = vmatprep.subr.mxu0 0.0
    %117 = vmatpush2.msra.mxu0 0.0
    %118 = vmatprep.subr.mxu0 0.0
    %119 = vmatpush2.msra.mxu0 0.0
    %120 = vmatprep.subr.mxu0 0.0
    %121 = vmatpush2.msra.mxu0 0.0
    %122 = vmatprep.subr.mxu0 0.0
    %123 = vmatpush2.msra.mxu0 0.0
    %124 = vmatprep.subr.mxu0 0.0
    %125 = vmatpush2.msra.mxu0 0.0
    %126 = vmatprep.subr.mxu0 0.0
    %127 = vmatpush2.msra.mxu0 0.0
    %128 = vmatprep.mubr.f32.mxu0 0.0
    %129 = vmatmul.mubr.f32.gmra.mxu0 %v37
    %v130 = vpop.f32.mrf.mxu0
    %v131 = vadd.f32 %v26, %v130
    %v132 = vpop.f32.mrf.mxu0
    %133 = vmatprep.mubr.f32.mxu0 0.0
    %134 = vmatmul.mubr.f32.gmra.mxu0 %v40
    %v135 = vpop.f32.mrf.mxu0
    %v136 = vadd.f32 %v26, %v135
    %v137 = vpop.f32.mrf.mxu0
    %138 = vmatprep.mubr.f32.mxu0 0.0
    %139 = vmatmul.mubr.f32.gmra.mxu0 %v43
    %v140 = vpop.f32.mrf.mxu0
    %v141 = vadd.f32 %v26, %v140
    %v142 = vpop.f32.mrf.mxu0
    %143 = vmatprep.mubr.f32.mxu0 0.0
    %144 = vmatmul.mubr.f32.gmra.mxu0 %v46
    %v145 = vpop.f32.mrf.mxu0
    %v146 = vadd.f32 %v26, %v145
    %v147 = vpop.f32.mrf.mxu0
    %148 = vmatprep.mubr.f32.mxu0 0.0
    %149 = vmatmul.mubr.f32.gmra.mxu0 %v49
    %v150 = vpop.f32.mrf.mxu0
    %v151 = vadd.f32 %v26, %v150
    %v152 = vpop.f32.mrf.mxu0
    %153 = vmatprep.mubr.f32.mxu0 0.0
    %154 = vmatmul.mubr.f32.gmra.mxu0 %v52
    %v155 = vpop.f32.mrf.mxu0
    %v156 = vadd.f32 %v26, %v155
    %v157 = vpop.f32.mrf.mxu0
    %158 = vmatprep.mubr.f32.mxu0 0.0
    %159 = vmatmul.mubr.f32.gmra.mxu0 %v55
    %v160 = vpop.f32.mrf.mxu0
    %v161 = vadd.f32 %v26, %v160
    %v162 = vpop.f32.mrf.mxu0
    %163 = vmatprep.mubr.f32.mxu0 0.0
    %164 = vmatmul.mubr.f32.gmra.mxu0 %v58
    %v165 = vpop.f32.mrf.mxu0
    %v166 = vadd.f32 %v26, %v165
    %v167 = vpop.f32.mrf.mxu0
    %168 = vdwg.mxu0
    %v169 = vld [vmem:[#allocation2 + $0x10] sm:$0xff]
    %v170 = vld [vmem:[#allocation2 + $0x18] sm:$0xff]
    %v171 = vld [vmem:[#allocation2 + $0x20] sm:$0xff]
    %v172 = vld [vmem:[#allocation2 + $0x28] sm:$0xff]
    %v173 = vld [vmem:[#allocation2 + $0x30] sm:$0xff]
    %v174 = vld [vmem:[#allocation2 + $0x38] sm:$0xff]
    %v175 = vld [vmem:[#allocation2 + $0x40] sm:$0xff]
    %v176 = vld [vmem:[#allocation2 + $0x48] sm:$0xff]
    %v177 = vld [vmem:[#allocation2 + $0x50] sm:$0xff]
    %v178 = vld [vmem:[#allocation2 + $0x58] sm:$0xff]
    %v179 = vld [vmem:[#allocation2 + $0x60] sm:$0xff]
    %v180 = vld [vmem:[#allocation2 + $0x68] sm:$0xff]
    %v181 = vld [vmem:[#allocation2 + $0x70] sm:$0xff]
    %v182 = vld [vmem:[#allocation2 + $0x78] sm:$0xff]
    %v183 = vld [vmem:[#allocation2 + $0x80] sm:$0xff]
    %v184 = vld [vmem:[#allocation2 + $0x88] sm:$0xff]
    %s185 = scalar_lea.vmem [#allocation2], 144
    %v186 = vld [vmem:[%s185] ss:$8 sm:$0x3]
    %v188 = vlaneseq
    %v189 = vshrl.u32 %v188, 7
    %v190 = vsub.s32 0, %v189
    %v191 = vrot.slane %v186, %v190
    %v192 = vlaneseq
    %v193 = vshrl.u32 %v192, 7
    %v194 = vsub.s32 1, %v193
    %v195 = vrot.slane %v186, %v194
    %v198 = vadd.f32 %v191, %v131
    %v199 = vxor.u32 %v198, 2147483648
    %v200 = vmul.f32 %v199, 1.442695
    %v201 = vpow.pop %v200
    %v202 = vadd.f32 %v201, 1.0
    %v203 = vrcp.pop %v202
    %v204 = vmul.f32 1.0, %v203
    %v205 = vtanh.pop %v198
    %207 = vrot.lane.b32.xlu0 %v205, 64
    %v208 = vpop.permute.xlu0 %207
    %v210 = vmul.f32 %v204, %v208
    %v211 = vtanh.pop %v210
    %213 = vrot.lane.b32.xlu0 %v211, 96
    %v214 = vpop.permute.xlu0 %213
    %v216 = vmul.f32 %v204, %v214
    %218 = vrot.lane.b32.xlu0 %v216, 32
    %v219 = vpop.permute.xlu0 %218
    %vm221 = vcmask 261120
    %v222 = vsel %vm221, %v219, 0.0
    %vm223 = vcmask 523264
    %v225 = vsel %vm223, %v222, 0
    %227 = vmatprep.subr.mxu0 0.0
    %228 = vmatpush1.msra.mxu0 0.0
    %229 = vmatprep.subr.mxu0 0.0
    %230 = vmatpush1.msra.mxu0 0.0
    %231 = vmatprep.subr.mxu0 0.0
    %232 = vmatpush1.msra.mxu0 0.0
    %233 = vmatprep.subr.mxu0 0.0
    %234 = vmatpush1.msra.mxu0 0.0
    %235 = vmatprep.subr.mxu0 0.0
    %236 = vmatpush1.msra.mxu0 0.0
    %237 = vmatprep.subr.mxu0 0.0
    %238 = vmatpush1.msra.mxu0 0.0
    %239 = vmatprep.subr.mxu0 0.0
    %240 = vmatpush1.msra.mxu0 0.0
    %241 = vmatprep.subr.mxu0 0.0
    %242 = vmatpush1.msra.mxu0 0.0
    %243 = vmatprep.subr.mxu0 %v184
    %244 = vmatpush1.msra.mxu0 %v183
    %245 = vmatprep.subr.mxu0 %v182
    %246 = vmatpush1.msra.mxu0 %v181
    %247 = vmatprep.subr.mxu0 %v180
    %248 = vmatpush1.msra.mxu0 %v179
    %249 = vmatprep.subr.mxu0 %v178
    %250 = vmatpush1.msra.mxu0 %v177
    %251 = vmatprep.subr.mxu0 %v176
    %252 = vmatpush1.msra.mxu0 %v175
    %253 = vmatprep.subr.mxu0 %v174
    %254 = vmatpush1.msra.mxu0 %v173
    %255 = vmatprep.subr.mxu0 %v172
    %256 = vmatpush1.msra.mxu0 %v171
    %257 = vmatprep.subr.mxu0 %v170
    %258 = vmatpush1.msra.mxu0 %v169
    %259 = vmatprep.subr.mxu0 0.0
    %260 = vmatpush2.msra.mxu0 0.0
    %261 = vmatprep.subr.mxu0 0.0
    %262 = vmatpush2.msra.mxu0 0.0
    %263 = vmatprep.subr.mxu0 0.0
    %264 = vmatpush2.msra.mxu0 0.0
    %265 = vmatprep.subr.mxu0 0.0
    %266 = vmatpush2.msra.mxu0 0.0
    %267 = vmatprep.subr.mxu0 0.0
    %268 = vmatpush2.msra.mxu0 0.0
    %269 = vmatprep.subr.mxu0 0.0
    %270 = vmatpush2.msra.mxu0 0.0
    %271 = vmatprep.subr.mxu0 0.0
    %272 = vmatpush2.msra.mxu0 0.0
    %273 = vmatprep.subr.mxu0 0.0
    %274 = vmatpush2.msra.mxu0 0.0
    %275 = vmatprep.subr.mxu0 0.0
    %276 = vmatpush2.msra.mxu0 0.0
    %277 = vmatprep.subr.mxu0 0.0
    %278 = vmatpush2.msra.mxu0 0.0
    %279 = vmatprep.subr.mxu0 0.0
    %280 = vmatpush2.msra.mxu0 0.0
    %281 = vmatprep.subr.mxu0 0.0
    %282 = vmatpush2.msra.mxu0 0.0
    %283 = vmatprep.subr.mxu0 0.0
    %284 = vmatpush2.msra.mxu0 0.0
    %285 = vmatprep.subr.mxu0 0.0
    %286 = vmatpush2.msra.mxu0 0.0
    %287 = vmatprep.subr.mxu0 0.0
    %288 = vmatpush2.msra.mxu0 0.0
    %289 = vmatprep.subr.mxu0 0.0
    %290 = vmatpush2.msra.mxu0 0.0
    %291 = vmatprep.mubr.f32.mxu0 0.0
    %292 = vmatmul.mubr.f32.gmra.mxu0 %v225
    %v293 = vpop.f32.mrf.mxu0
    %v294 = vadd.f32 %v191, %v293
    %v295 = vpop.f32.mrf.mxu0
    %v296 = vadd.f32 %v195, %v295
    %297 = vdwg.mxu0
    %v298 = vadd.f32 %v294, %v136
    %v299 = vxor.u32 %v298, 2147483648
    %v300 = vmul.f32 %v299, 1.442695
    %v301 = vpow.pop %v300
    %v302 = vadd.f32 %v301, 1.0
    %v303 = vrcp.pop %v302
    %v304 = vmul.f32 1.0, %v303
    %v305 = vtanh.pop %v298
    %307 = vrot.lane.b32.xlu0 %v210, 32
    %v308 = vpop.permute.xlu0 %307
    %v310 = vmul.f32 %v304, %v308
    %312 = vrot.lane.b32.xlu0 %v305, 64
    %v313 = vpop.permute.xlu0 %312
    %v315 = vmul.f32 %v304, %v313
    %317 = vrot.lane.b32.xlu0 %v315, 32
    %v318 = vpop.permute.xlu0 %317
    %v320 = vadd.f32 %v310, %v318
    %v321 = vtanh.pop %v320
    %323 = vrot.lane.b32.xlu0 %v321, 64
    %v324 = vpop.permute.xlu0 %323
    %v326 = vmul.f32 %v304, %v324
    %v327 = vxor.u32 %v296, 2147483648
    %v328 = vmul.f32 %v327, 1.442695
    %v329 = vpow.pop %v328
    %v330 = vadd.f32 %v329, 1.0
    %v331 = vrcp.pop %v330
    %v332 = vmul.f32 1.0, %v331
    %v333 = vtanh.pop %v296
    %335 = vrot.lane.b32.xlu0 %v333, 64
    %v336 = vpop.permute.xlu0 %335
    %v338 = vmul.f32 %v332, %v336
    %v339 = vtanh.pop %v338
    %341 = vrot.lane.b32.xlu0 %v339, 96
    %v342 = vpop.permute.xlu0 %341
    %v344 = vmul.f32 %v332, %v342
    %346 = vrot.lane.b32.xlu0 %v326, 32
    %v347 = vpop.permute.xlu0 %346
    %350 = vrot.lane.b32.xlu0 %v344, 64
    %v351 = vpop.permute.xlu0 %350
    %v353 = vsel %vm221, %v347, %v351
    %v355 = vsel %vm223, %v353, 0
    %357 = vmatprep.subr.mxu0 0.0
    %358 = vmatpush1.msra.mxu0 0.0
    %359 = vmatprep.subr.mxu0 0.0
    %360 = vmatpush1.msra.mxu0 0.0
    %361 = vmatprep.subr.mxu0 0.0
    %362 = vmatpush1.msra.mxu0 0.0
    %363 = vmatprep.subr.mxu0 0.0
    %364 = vmatpush1.msra.mxu0 0.0
    %365 = vmatprep.subr.mxu0 0.0
    %366 = vmatpush1.msra.mxu0 0.0
    %367 = vmatprep.subr.mxu0 0.0
    %368 = vmatpush1.msra.mxu0 0.0
    %369 = vmatprep.subr.mxu0 0.0
    %370 = vmatpush1.msra.mxu0 0.0
    %371 = vmatprep.subr.mxu0 0.0
    %372 = vmatpush1.msra.mxu0 0.0
    %373 = vmatprep.subr.mxu0 %v184
    %374 = vmatpush1.msra.mxu0 %v183
    %375 = vmatprep.subr.mxu0 %v182
    %376 = vmatpush1.msra.mxu0 %v181
    %377 = vmatprep.subr.mxu0 %v180
    %378 = vmatpush1.msra.mxu0 %v179
    %379 = vmatprep.subr.mxu0 %v178
    %380 = vmatpush1.msra.mxu0 %v177
    %381 = vmatprep.subr.mxu0 %v176
    %382 = vmatpush1.msra.mxu0 %v175
    %383 = vmatprep.subr.mxu0 %v174
    %384 = vmatpush1.msra.mxu0 %v173
    %385 = vmatprep.subr.mxu0 %v172
    %386 = vmatpush1.msra.mxu0 %v171
    %387 = vmatprep.subr.mxu0 %v170
    %388 = vmatpush1.msra.mxu0 %v169
    %389 = vmatprep.subr.mxu0 0.0
    %390 = vmatpush2.msra.mxu0 0.0
    %391 = vmatprep.subr.mxu0 0.0
    %392 = vmatpush2.msra.mxu0 0.0
    %393 = vmatprep.subr.mxu0 0.0
    %394 = vmatpush2.msra.mxu0 0.0
    %395 = vmatprep.subr.mxu0 0.0
    %396 = vmatpush2.msra.mxu0 0.0
    %397 = vmatprep.subr.mxu0 0.0
    %398 = vmatpush2.msra.mxu0 0.0
    %399 = vmatprep.subr.mxu0 0.0
    %400 = vmatpush2.msra.mxu0 0.0
    %401 = vmatprep.subr.mxu0 0.0
    %402 = vmatpush2.msra.mxu0 0.0
    %403 = vmatprep.subr.mxu0 0.0
    %404 = vmatpush2.msra.mxu0 0.0
    %405 = vmatprep.subr.mxu0 0.0
    %406 = vmatpush2.msra.mxu0 0.0
    %407 = vmatprep.subr.mxu0 0.0
    %408 = vmatpush2.msra.mxu0 0.0
    %409 = vmatprep.subr.mxu0 0.0
    %410 = vmatpush2.msra.mxu0 0.0
    %411 = vmatprep.subr.mxu0 0.0
    %412 = vmatpush2.msra.mxu0 0.0
    %413 = vmatprep.subr.mxu0 0.0
    %414 = vmatpush2.msra.mxu0 0.0
    %415 = vmatprep.subr.mxu0 0.0
    %416 = vmatpush2.msra.mxu0 0.0
    %417 = vmatprep.subr.mxu0 0.0
    %418 = vmatpush2.msra.mxu0 0.0
    %419 = vmatprep.subr.mxu0 0.0
    %420 = vmatpush2.msra.mxu0 0.0
    %421 = vmatprep.mubr.f32.mxu0 0.0
    %422 = vmatmul.mubr.f32.gmra.mxu0 %v355
    %v423 = vpop.f32.mrf.mxu0
    %v424 = vadd.f32 %v191, %v423
    %v425 = vpop.f32.mrf.mxu0
    %v426 = vadd.f32 %v195, %v425
    %427 = vdwg.mxu0
    %v428 = vadd.f32 %v424, %v141
    %v429 = vxor.u32 %v428, 2147483648
    %v430 = vmul.f32 %v429, 1.442695
    %v431 = vpow.pop %v430
    %v432 = vadd.f32 %v431, 1.0
    %v433 = vrcp.pop %v432
    %v434 = vmul.f32 1.0, %v433
    %v435 = vtanh.pop %v428
    %v436 = vmul.f32 %v434, %v320
    %438 = vrot.lane.b32.xlu0 %v435, 64
    %v439 = vpop.permute.xlu0 %438
    %v441 = vmul.f32 %v434, %v439
    %443 = vrot.lane.b32.xlu0 %v441, 32
    %v444 = vpop.permute.xlu0 %443
    %v446 = vadd.f32 %v436, %v444
    %v447 = vtanh.pop %v446
    %449 = vrot.lane.b32.xlu0 %v447, 64
    %v450 = vpop.permute.xlu0 %449
    %v452 = vmul.f32 %v434, %v450
    %v453 = vxor.u32 %v426, 2147483648
    %v454 = vmul.f32 %v453, 1.442695
    %v455 = vpow.pop %v454
    %v456 = vadd.f32 %v455, 1.0
    %v457 = vrcp.pop %v456
    %v458 = vmul.f32 1.0, %v457
    %v459 = vtanh.pop %v426
    %461 = vrot.lane.b32.xlu0 %v338, 32
    %v462 = vpop.permute.xlu0 %461
    %v464 = vmul.f32 %v458, %v462
    %466 = vrot.lane.b32.xlu0 %v459, 64
    %v467 = vpop.permute.xlu0 %466
    %v469 = vmul.f32 %v458, %v467
    %471 = vrot.lane.b32.xlu0 %v469, 32
    %v472 = vpop.permute.xlu0 %471
    %v474 = vadd.f32 %v464, %v472
    %v475 = vtanh.pop %v474
    %477 = vrot.lane.b32.xlu0 %v475, 64
    %v478 = vpop.permute.xlu0 %477
    %v480 = vmul.f32 %v458, %v478
    %482 = vrot.lane.b32.xlu0 %v452, 32
    %v483 = vpop.permute.xlu0 %482
    %486 = vrot.lane.b32.xlu0 %v480, 64
    %v487 = vpop.permute.xlu0 %486
    %v489 = vsel %vm221, %v483, %v487
    %v491 = vsel %vm223, %v489, 0
    %493 = vmatprep.subr.mxu0 0.0
    %494 = vmatpush1.msra.mxu0 0.0
    %495 = vmatprep.subr.mxu0 0.0
    %496 = vmatpush1.msra.mxu0 0.0
    %497 = vmatprep.subr.mxu0 0.0
    %498 = vmatpush1.msra.mxu0 0.0
    %499 = vmatprep.subr.mxu0 0.0
    %500 = vmatpush1.msra.mxu0 0.0
    %501 = vmatprep.subr.mxu0 0.0
    %502 = vmatpush1.msra.mxu0 0.0
    %503 = vmatprep.subr.mxu0 0.0
    %504 = vmatpush1.msra.mxu0 0.0
    %505 = vmatprep.subr.mxu0 0.0
    %506 = vmatpush1.msra.mxu0 0.0
    %507 = vmatprep.subr.mxu0 0.0
    %508 = vmatpush1.msra.mxu0 0.0
    %509 = vmatprep.subr.mxu0 %v184
    %510 = vmatpush1.msra.mxu0 %v183
    %511 = vmatprep.subr.mxu0 %v182
    %512 = vmatpush1.msra.mxu0 %v181
    %513 = vmatprep.subr.mxu0 %v180
    %514 = vmatpush1.msra.mxu0 %v179
    %515 = vmatprep.subr.mxu0 %v178
    %516 = vmatpush1.msra.mxu0 %v177
    %517 = vmatprep.subr.mxu0 %v176
    %518 = vmatpush1.msra.mxu0 %v175
    %519 = vmatprep.subr.mxu0 %v174
    %520 = vmatpush1.msra.mxu0 %v173
    %521 = vmatprep.subr.mxu0 %v172
    %522 = vmatpush1.msra.mxu0 %v171
    %523 = vmatprep.subr.mxu0 %v170
    %524 = vmatpush1.msra.mxu0 %v169
    %525 = vmatprep.subr.mxu0 0.0
    %526 = vmatpush2.msra.mxu0 0.0
    %527 = vmatprep.subr.mxu0 0.0
    %528 = vmatpush2.msra.mxu0 0.0
    %529 = vmatprep.subr.mxu0 0.0
    %530 = vmatpush2.msra.mxu0 0.0
    %531 = vmatprep.subr.mxu0 0.0
    %532 = vmatpush2.msra.mxu0 0.0
    %533 = vmatprep.subr.mxu0 0.0
    %534 = vmatpush2.msra.mxu0 0.0
    %535 = vmatprep.subr.mxu0 0.0
    %536 = vmatpush2.msra.mxu0 0.0
    %537 = vmatprep.subr.mxu0 0.0
    %538 = vmatpush2.msra.mxu0 0.0
    %539 = vmatprep.subr.mxu0 0.0
    %540 = vmatpush2.msra.mxu0 0.0
    %541 = vmatprep.subr.mxu0 0.0
    %542 = vmatpush2.msra.mxu0 0.0
    %543 = vmatprep.subr.mxu0 0.0
    %544 = vmatpush2.msra.mxu0 0.0
    %545 = vmatprep.subr.mxu0 0.0
    %546 = vmatpush2.msra.mxu0 0.0
    %547 = vmatprep.subr.mxu0 0.0
    %548 = vmatpush2.msra.mxu0 0.0
    %549 = vmatprep.subr.mxu0 0.0
    %550 = vmatpush2.msra.mxu0 0.0
    %551 = vmatprep.subr.mxu0 0.0
    %552 = vmatpush2.msra.mxu0 0.0
    %553 = vmatprep.subr.mxu0 0.0
    %554 = vmatpush2.msra.mxu0 0.0
    %555 = vmatprep.subr.mxu0 0.0
    %556 = vmatpush2.msra.mxu0 0.0
    %557 = vmatprep.mubr.f32.mxu0 0.0
    %558 = vmatmul.mubr.f32.gmra.mxu0 %v491
    %v559 = vpop.f32.mrf.mxu0
    %v560 = vadd.f32 %v191, %v559
    %v561 = vpop.f32.mrf.mxu0
    %v562 = vadd.f32 %v195, %v561
    %563 = vdwg.mxu0
    %v564 = vadd.f32 %v560, %v146
    %v565 = vxor.u32 %v564, 2147483648
    %v566 = vmul.f32 %v565, 1.442695
    %v567 = vpow.pop %v566
    %v568 = vadd.f32 %v567, 1.0
    %v569 = vrcp.pop %v568
    %v570 = vmul.f32 1.0, %v569
    %v571 = vtanh.pop %v564
    %v572 = vmul.f32 %v570, %v446
    %574 = vrot.lane.b32.xlu0 %v571, 64
    %v575 = vpop.permute.xlu0 %574
    %v577 = vmul.f32 %v570, %v575
    %579 = vrot.lane.b32.xlu0 %v577, 32
    %v580 = vpop.permute.xlu0 %579
    %v582 = vadd.f32 %v572, %v580
    %v583 = vtanh.pop %v582
    %585 = vrot.lane.b32.xlu0 %v583, 64
    %v586 = vpop.permute.xlu0 %585
    %v588 = vmul.f32 %v570, %v586
    %v589 = vxor.u32 %v562, 2147483648
    %v590 = vmul.f32 %v589, 1.442695
    %v591 = vpow.pop %v590
    %v592 = vadd.f32 %v591, 1.0
    %v593 = vrcp.pop %v592
    %v594 = vmul.f32 1.0, %v593
    %v595 = vtanh.pop %v562
    %v596 = vmul.f32 %v594, %v474
    %598 = vrot.lane.b32.xlu0 %v595, 64
    %v599 = vpop.permute.xlu0 %598
    %v601 = vmul.f32 %v594, %v599
    %603 = vrot.lane.b32.xlu0 %v601, 32
    %v604 = vpop.permute.xlu0 %603
    %v606 = vadd.f32 %v596, %v604
    %v607 = vtanh.pop %v606
    %609 = vrot.lane.b32.xlu0 %v607, 64
    %v610 = vpop.permute.xlu0 %609
    %v612 = vmul.f32 %v594, %v610
    %614 = vrot.lane.b32.xlu0 %v588, 32
    %v615 = vpop.permute.xlu0 %614
    %618 = vrot.lane.b32.xlu0 %v612, 64
    %v619 = vpop.permute.xlu0 %618
    %v621 = vsel %vm221, %v615, %v619
    %v623 = vsel %vm223, %v621, 0
    %625 = vmatprep.subr.mxu0 0.0
    %626 = vmatpush1.msra.mxu0 0.0
    %627 = vmatprep.subr.mxu0 0.0
    %628 = vmatpush1.msra.mxu0 0.0
    %629 = vmatprep.subr.mxu0 0.0
    %630 = vmatpush1.msra.mxu0 0.0
    %631 = vmatprep.subr.mxu0 0.0
    %632 = vmatpush1.msra.mxu0 0.0
    %633 = vmatprep.subr.mxu0 0.0
    %634 = vmatpush1.msra.mxu0 0.0
    %635 = vmatprep.subr.mxu0 0.0
    %636 = vmatpush1.msra.mxu0 0.0
    %637 = vmatprep.subr.mxu0 0.0
    %638 = vmatpush1.msra.mxu0 0.0
    %639 = vmatprep.subr.mxu0 0.0
    %640 = vmatpush1.msra.mxu0 0.0
    %641 = vmatprep.subr.mxu0 %v184
    %642 = vmatpush1.msra.mxu0 %v183
    %643 = vmatprep.subr.mxu0 %v182
    %644 = vmatpush1.msra.mxu0 %v181
    %645 = vmatprep.subr.mxu0 %v180
    %646 = vmatpush1.msra.mxu0 %v179
    %647 = vmatprep.subr.mxu0 %v178
    %648 = vmatpush1.msra.mxu0 %v177
    %649 = vmatprep.subr.mxu0 %v176
    %650 = vmatpush1.msra.mxu0 %v175
    %651 = vmatprep.subr.mxu0 %v174
    %652 = vmatpush1.msra.mxu0 %v173
    %653 = vmatprep.subr.mxu0 %v172
    %654 = vmatpush1.msra.mxu0 %v171
    %655 = vmatprep.subr.mxu0 %v170
    %656 = vmatpush1.msra.mxu0 %v169
    %657 = vmatprep.subr.mxu0 0.0
    %658 = vmatpush2.msra.mxu0 0.0
    %659 = vmatprep.subr.mxu0 0.0
    %660 = vmatpush2.msra.mxu0 0.0
    %661 = vmatprep.subr.mxu0 0.0
    %662 = vmatpush2.msra.mxu0 0.0
    %663 = vmatprep.subr.mxu0 0.0
    %664 = vmatpush2.msra.mxu0 0.0
    %665 = vmatprep.subr.mxu0 0.0
    %666 = vmatpush2.msra.mxu0 0.0
    %667 = vmatprep.subr.mxu0 0.0
    %668 = vmatpush2.msra.mxu0 0.0
    %669 = vmatprep.subr.mxu0 0.0
    %670 = vmatpush2.msra.mxu0 0.0
    %671 = vmatprep.subr.mxu0 0.0
    %672 = vmatpush2.msra.mxu0 0.0
    %673 = vmatprep.subr.mxu0 0.0
    %674 = vmatpush2.msra.mxu0 0.0
    %675 = vmatprep.subr.mxu0 0.0
    %676 = vmatpush2.msra.mxu0 0.0
    %677 = vmatprep.subr.mxu0 0.0
    %678 = vmatpush2.msra.mxu0 0.0
    %679 = vmatprep.subr.mxu0 0.0
    %680 = vmatpush2.msra.mxu0 0.0
    %681 = vmatprep.subr.mxu0 0.0
    %682 = vmatpush2.msra.mxu0 0.0
    %683 = vmatprep.subr.mxu0 0.0
    %684 = vmatpush2.msra.mxu0 0.0
    %685 = vmatprep.subr.mxu0 0.0
    %686 = vmatpush2.msra.mxu0 0.0
    %687 = vmatprep.subr.mxu0 0.0
    %688 = vmatpush2.msra.mxu0 0.0
    %689 = vmatprep.mubr.f32.mxu0 0.0
    %690 = vmatmul.mubr.f32.gmra.mxu0 %v623
    %v691 = vpop.f32.mrf.mxu0
    %v692 = vadd.f32 %v191, %v691
    %v693 = vpop.f32.mrf.mxu0
    %v694 = vadd.f32 %v195, %v693
    %695 = vdwg.mxu0
    %v696 = vadd.f32 %v692, %v151
    %v697 = vxor.u32 %v696, 2147483648
    %v698 = vmul.f32 %v697, 1.442695
    %v699 = vpow.pop %v698
    %v700 = vadd.f32 %v699, 1.0
    %v701 = vrcp.pop %v700
    %v702 = vmul.f32 1.0, %v701
    %v703 = vtanh.pop %v696
    %v704 = vmul.f32 %v702, %v582
    %706 = vrot.lane.b32.xlu0 %v703, 64
    %v707 = vpop.permute.xlu0 %706
    %v709 = vmul.f32 %v702, %v707
    %711 = vrot.lane.b32.xlu0 %v709, 32
    %v712 = vpop.permute.xlu0 %711
    %v714 = vadd.f32 %v704, %v712
    %v715 = vtanh.pop %v714
    %717 = vrot.lane.b32.xlu0 %v715, 64
    %v718 = vpop.permute.xlu0 %717
    %v720 = vmul.f32 %v702, %v718
    %v721 = vxor.u32 %v694, 2147483648
    %v722 = vmul.f32 %v721, 1.442695
    %v723 = vpow.pop %v722
    %v724 = vadd.f32 %v723, 1.0
    %v725 = vrcp.pop %v724
    %v726 = vmul.f32 1.0, %v725
    %v727 = vtanh.pop %v694
    %v728 = vmul.f32 %v726, %v606
    %730 = vrot.lane.b32.xlu0 %v727, 64
    %v731 = vpop.permute.xlu0 %730
    %v733 = vmul.f32 %v726, %v731
    %735 = vrot.lane.b32.xlu0 %v733, 32
    %v736 = vpop.permute.xlu0 %735
    %v738 = vadd.f32 %v728, %v736
    %v739 = vtanh.pop %v738
    %741 = vrot.lane.b32.xlu0 %v739, 64
    %v742 = vpop.permute.xlu0 %741
    %v744 = vmul.f32 %v726, %v742
    %746 = vrot.lane.b32.xlu0 %v720, 32
    %v747 = vpop.permute.xlu0 %746
    %750 = vrot.lane.b32.xlu0 %v744, 64
    %v751 = vpop.permute.xlu0 %750
    %v753 = vsel %vm221, %v747, %v751
    %v755 = vsel %vm223, %v753, 0
    %757 = vmatprep.subr.mxu0 0.0
    %758 = vmatpush1.msra.mxu0 0.0
    %759 = vmatprep.subr.mxu0 0.0
    %760 = vmatpush1.msra.mxu0 0.0
    %761 = vmatprep.subr.mxu0 0.0
    %762 = vmatpush1.msra.mxu0 0.0
    %763 = vmatprep.subr.mxu0 0.0
    %764 = vmatpush1.msra.mxu0 0.0
    %765 = vmatprep.subr.mxu0 0.0
    %766 = vmatpush1.msra.mxu0 0.0
    %767 = vmatprep.subr.mxu0 0.0
    %768 = vmatpush1.msra.mxu0 0.0
    %769 = vmatprep.subr.mxu0 0.0
    %770 = vmatpush1.msra.mxu0 0.0
    %771 = vmatprep.subr.mxu0 0.0
    %772 = vmatpush1.msra.mxu0 0.0
    %773 = vmatprep.subr.mxu0 %v184
    %774 = vmatpush1.msra.mxu0 %v183
    %775 = vmatprep.subr.mxu0 %v182
    %776 = vmatpush1.msra.mxu0 %v181
    %777 = vmatprep.subr.mxu0 %v180
    %778 = vmatpush1.msra.mxu0 %v179
    %779 = vmatprep.subr.mxu0 %v178
    %780 = vmatpush1.msra.mxu0 %v177
    %781 = vmatprep.subr.mxu0 %v176
    %782 = vmatpush1.msra.mxu0 %v175
    %783 = vmatprep.subr.mxu0 %v174
    %784 = vmatpush1.msra.mxu0 %v173
    %785 = vmatprep.subr.mxu0 %v172
    %786 = vmatpush1.msra.mxu0 %v171
    %787 = vmatprep.subr.mxu0 %v170
    %788 = vmatpush1.msra.mxu0 %v169
    %789 = vmatprep.subr.mxu0 0.0
    %790 = vmatpush2.msra.mxu0 0.0
    %791 = vmatprep.subr.mxu0 0.0
    %792 = vmatpush2.msra.mxu0 0.0
    %793 = vmatprep.subr.mxu0 0.0
    %794 = vmatpush2.msra.mxu0 0.0
    %795 = vmatprep.subr.mxu0 0.0
    %796 = vmatpush2.msra.mxu0 0.0
    %797 = vmatprep.subr.mxu0 0.0
    %798 = vmatpush2.msra.mxu0 0.0
    %799 = vmatprep.subr.mxu0 0.0
    %800 = vmatpush2.msra.mxu0 0.0
    %801 = vmatprep.subr.mxu0 0.0
    %802 = vmatpush2.msra.mxu0 0.0
    %803 = vmatprep.subr.mxu0 0.0
    %804 = vmatpush2.msra.mxu0 0.0
    %805 = vmatprep.subr.mxu0 0.0
    %806 = vmatpush2.msra.mxu0 0.0
    %807 = vmatprep.subr.mxu0 0.0
    %808 = vmatpush2.msra.mxu0 0.0
    %809 = vmatprep.subr.mxu0 0.0
    %810 = vmatpush2.msra.mxu0 0.0
    %811 = vmatprep.subr.mxu0 0.0
    %812 = vmatpush2.msra.mxu0 0.0
    %813 = vmatprep.subr.mxu0 0.0
    %814 = vmatpush2.msra.mxu0 0.0
    %815 = vmatprep.subr.mxu0 0.0
    %816 = vmatpush2.msra.mxu0 0.0
    %817 = vmatprep.subr.mxu0 0.0
    %818 = vmatpush2.msra.mxu0 0.0
    %819 = vmatprep.subr.mxu0 0.0
    %820 = vmatpush2.msra.mxu0 0.0
    %821 = vmatprep.mubr.f32.mxu0 0.0
    %822 = vmatmul.mubr.f32.gmra.mxu0 %v755
    %v823 = vpop.f32.mrf.mxu0
    %v824 = vadd.f32 %v191, %v823
    %v825 = vpop.f32.mrf.mxu0
    %v826 = vadd.f32 %v195, %v825
    %827 = vdwg.mxu0
    %v828 = vadd.f32 %v824, %v156
    %v829 = vxor.u32 %v828, 2147483648
    %v830 = vmul.f32 %v829, 1.442695
    %v831 = vpow.pop %v830
    %v832 = vadd.f32 %v831, 1.0
    %v833 = vrcp.pop %v832
    %v834 = vmul.f32 1.0, %v833
    %v835 = vtanh.pop %v828
    %v836 = vmul.f32 %v834, %v714
    %838 = vrot.lane.b32.xlu0 %v835, 64
    %v839 = vpop.permute.xlu0 %838
    %v841 = vmul.f32 %v834, %v839
    %843 = vrot.lane.b32.xlu0 %v841, 32
    %v844 = vpop.permute.xlu0 %843
    %v846 = vadd.f32 %v836, %v844
    %v847 = vtanh.pop %v846
    %849 = vrot.lane.b32.xlu0 %v847, 64
    %v850 = vpop.permute.xlu0 %849
    %v852 = vmul.f32 %v834, %v850
    %v853 = vxor.u32 %v826, 2147483648
    %v854 = vmul.f32 %v853, 1.442695
    %v855 = vpow.pop %v854
    %v856 = vadd.f32 %v855, 1.0
    %v857 = vrcp.pop %v856
    %v858 = vmul.f32 1.0, %v857
    %v859 = vtanh.pop %v826
    %v860 = vmul.f32 %v858, %v738
    %862 = vrot.lane.b32.xlu0 %v859, 64
    %v863 = vpop.permute.xlu0 %862
    %v865 = vmul.f32 %v858, %v863
    %867 = vrot.lane.b32.xlu0 %v865, 32
    %v868 = vpop.permute.xlu0 %867
    %v870 = vadd.f32 %v860, %v868
    %v871 = vtanh.pop %v870
    %873 = vrot.lane.b32.xlu0 %v871, 64
    %v874 = vpop.permute.xlu0 %873
    %v876 = vmul.f32 %v858, %v874
    %878 = vrot.lane.b32.xlu0 %v852, 32
    %v879 = vpop.permute.xlu0 %878
    %882 = vrot.lane.b32.xlu0 %v876, 64
    %v883 = vpop.permute.xlu0 %882
    %v885 = vsel %vm221, %v879, %v883
    %v887 = vsel %vm223, %v885, 0
    %889 = vmatprep.subr.mxu0 0.0
    %890 = vmatpush1.msra.mxu0 0.0
    %891 = vmatprep.subr.mxu0 0.0
    %892 = vmatpush1.msra.mxu0 0.0
    %893 = vmatprep.subr.mxu0 0.0
    %894 = vmatpush1.msra.mxu0 0.0
    %895 = vmatprep.subr.mxu0 0.0
    %896 = vmatpush1.msra.mxu0 0.0
    %897 = vmatprep.subr.mxu0 0.0
    %898 = vmatpush1.msra.mxu0 0.0
    %899 = vmatprep.subr.mxu0 0.0
    %900 = vmatpush1.msra.mxu0 0.0
    %901 = vmatprep.subr.mxu0 0.0
    %902 = vmatpush1.msra.mxu0 0.0
    %903 = vmatprep.subr.mxu0 0.0
    %904 = vmatpush1.msra.mxu0 0.0
    %905 = vmatprep.subr.mxu0 %v184
    %906 = vmatpush1.msra.mxu0 %v183
    %907 = vmatprep.subr.mxu0 %v182
    %908 = vmatpush1.msra.mxu0 %v181
    %909 = vmatprep.subr.mxu0 %v180
    %910 = vmatpush1.msra.mxu0 %v179
    %911 = vmatprep.subr.mxu0 %v178
    %912 = vmatpush1.msra.mxu0 %v177
    %913 = vmatprep.subr.mxu0 %v176
    %914 = vmatpush1.msra.mxu0 %v175
    %915 = vmatprep.subr.mxu0 %v174
    %916 = vmatpush1.msra.mxu0 %v173
    %917 = vmatprep.subr.mxu0 %v172
    %918 = vmatpush1.msra.mxu0 %v171
    %919 = vmatprep.subr.mxu0 %v170
    %920 = vmatpush1.msra.mxu0 %v169
    %921 = vmatprep.subr.mxu0 0.0
    %922 = vmatpush2.msra.mxu0 0.0
    %923 = vmatprep.subr.mxu0 0.0
    %924 = vmatpush2.msra.mxu0 0.0
    %925 = vmatprep.subr.mxu0 0.0
    %926 = vmatpush2.msra.mxu0 0.0
    %927 = vmatprep.subr.mxu0 0.0
    %928 = vmatpush2.msra.mxu0 0.0
    %929 = vmatprep.subr.mxu0 0.0
    %930 = vmatpush2.msra.mxu0 0.0
    %931 = vmatprep.subr.mxu0 0.0
    %932 = vmatpush2.msra.mxu0 0.0
    %933 = vmatprep.subr.mxu0 0.0
    %934 = vmatpush2.msra.mxu0 0.0
    %935 = vmatprep.subr.mxu0 0.0
    %936 = vmatpush2.msra.mxu0 0.0
    %937 = vmatprep.subr.mxu0 0.0
    %938 = vmatpush2.msra.mxu0 0.0
    %939 = vmatprep.subr.mxu0 0.0
    %940 = vmatpush2.msra.mxu0 0.0
    %941 = vmatprep.subr.mxu0 0.0
    %942 = vmatpush2.msra.mxu0 0.0
    %943 = vmatprep.subr.mxu0 0.0
    %944 = vmatpush2.msra.mxu0 0.0
    %945 = vmatprep.subr.mxu0 0.0
    %946 = vmatpush2.msra.mxu0 0.0
    %947 = vmatprep.subr.mxu0 0.0
    %948 = vmatpush2.msra.mxu0 0.0
    %949 = vmatprep.subr.mxu0 0.0
    %950 = vmatpush2.msra.mxu0 0.0
    %951 = vmatprep.subr.mxu0 0.0
    %952 = vmatpush2.msra.mxu0 0.0
    %953 = vmatprep.mubr.f32.mxu0 0.0
    %954 = vmatmul.mubr.f32.gmra.mxu0 %v887
    %v955 = vpop.f32.mrf.mxu0
    %v956 = vadd.f32 %v191, %v955
    %v957 = vpop.f32.mrf.mxu0
    %v958 = vadd.f32 %v195, %v957
    %959 = vdwg.mxu0
    %v960 = vadd.f32 %v956, %v161
    %v961 = vxor.u32 %v960, 2147483648
    %v962 = vmul.f32 %v961, 1.442695
    %v963 = vpow.pop %v962
    %v964 = vadd.f32 %v963, 1.0
    %v965 = vrcp.pop %v964
    %v966 = vmul.f32 1.0, %v965
    %v967 = vtanh.pop %v960
    %v968 = vmul.f32 %v966, %v846
    %970 = vrot.lane.b32.xlu0 %v967, 64
    %v971 = vpop.permute.xlu0 %970
    %v973 = vmul.f32 %v966, %v971
    %975 = vrot.lane.b32.xlu0 %v973, 32
    %v976 = vpop.permute.xlu0 %975
    %v978 = vadd.f32 %v968, %v976
    %v979 = vtanh.pop %v978
    %981 = vrot.lane.b32.xlu0 %v979, 64
    %v982 = vpop.permute.xlu0 %981
    %v984 = vmul.f32 %v966, %v982
    %v985 = vxor.u32 %v958, 2147483648
    %v986 = vmul.f32 %v985, 1.442695
    %v987 = vpow.pop %v986
    %v988 = vadd.f32 %v987, 1.0
    %v989 = vrcp.pop %v988
    %v990 = vmul.f32 1.0, %v989
    %v991 = vtanh.pop %v958
    %v992 = vmul.f32 %v990, %v870
    %994 = vrot.lane.b32.xlu0 %v991, 64
    %v995 = vpop.permute.xlu0 %994
    %v997 = vmul.f32 %v990, %v995
    %999 = vrot.lane.b32.xlu0 %v997, 32
    %v1000 = vpop.permute.xlu0 %999
    %v1002 = vadd.f32 %v992, %v1000
    %v1003 = vtanh.pop %v1002
    %1005 = vrot.lane.b32.xlu0 %v1003, 64
    %v1006 = vpop.permute.xlu0 %1005
    %v1008 = vmul.f32 %v990, %v1006
    %1010 = vrot.lane.b32.xlu0 %v984, 32
    %v1011 = vpop.permute.xlu0 %1010
    %1014 = vrot.lane.b32.xlu0 %v1008, 64
    %v1015 = vpop.permute.xlu0 %1014
    %v1017 = vsel %vm221, %v1011, %v1015
    %v1019 = vsel %vm223, %v1017, 0
    %1021 = vmatprep.subr.mxu0 0.0
    %1022 = vmatpush1.msra.mxu0 0.0
    %1023 = vmatprep.subr.mxu0 0.0
    %1024 = vmatpush1.msra.mxu0 0.0
    %1025 = vmatprep.subr.mxu0 0.0
    %1026 = vmatpush1.msra.mxu0 0.0
    %1027 = vmatprep.subr.mxu0 0.0
    %1028 = vmatpush1.msra.mxu0 0.0
    %1029 = vmatprep.subr.mxu0 0.0
    %1030 = vmatpush1.msra.mxu0 0.0
    %1031 = vmatprep.subr.mxu0 0.0
    %1032 = vmatpush1.msra.mxu0 0.0
    %1033 = vmatprep.subr.mxu0 0.0
    %1034 = vmatpush1.msra.mxu0 0.0
    %1035 = vmatprep.subr.mxu0 0.0
    %1036 = vmatpush1.msra.mxu0 0.0
    %1037 = vmatprep.subr.mxu0 %v184
    %1038 = vmatpush1.msra.mxu0 %v183
    %1039 = vmatprep.subr.mxu0 %v182
    %1040 = vmatpush1.msra.mxu0 %v181
    %1041 = vmatprep.subr.mxu0 %v180
    %1042 = vmatpush1.msra.mxu0 %v179
    %1043 = vmatprep.subr.mxu0 %v178
    %1044 = vmatpush1.msra.mxu0 %v177
    %1045 = vmatprep.subr.mxu0 %v176
    %1046 = vmatpush1.msra.mxu0 %v175
    %1047 = vmatprep.subr.mxu0 %v174
    %1048 = vmatpush1.msra.mxu0 %v173
    %1049 = vmatprep.subr.mxu0 %v172
    %1050 = vmatpush1.msra.mxu0 %v171
    %1051 = vmatprep.subr.mxu0 %v170
    %1052 = vmatpush1.msra.mxu0 %v169
    %1053 = vmatprep.subr.mxu0 0.0
    %1054 = vmatpush2.msra.mxu0 0.0
    %1055 = vmatprep.subr.mxu0 0.0
    %1056 = vmatpush2.msra.mxu0 0.0
    %1057 = vmatprep.subr.mxu0 0.0
    %1058 = vmatpush2.msra.mxu0 0.0
    %1059 = vmatprep.subr.mxu0 0.0
    %1060 = vmatpush2.msra.mxu0 0.0
    %1061 = vmatprep.subr.mxu0 0.0
    %1062 = vmatpush2.msra.mxu0 0.0
    %1063 = vmatprep.subr.mxu0 0.0
    %1064 = vmatpush2.msra.mxu0 0.0
    %1065 = vmatprep.subr.mxu0 0.0
    %1066 = vmatpush2.msra.mxu0 0.0
    %1067 = vmatprep.subr.mxu0 0.0
    %1068 = vmatpush2.msra.mxu0 0.0
    %1069 = vmatprep.subr.mxu0 0.0
    %1070 = vmatpush2.msra.mxu0 0.0
    %1071 = vmatprep.subr.mxu0 0.0
    %1072 = vmatpush2.msra.mxu0 0.0
    %1073 = vmatprep.subr.mxu0 0.0
    %1074 = vmatpush2.msra.mxu0 0.0
    %1075 = vmatprep.subr.mxu0 0.0
    %1076 = vmatpush2.msra.mxu0 0.0
    %1077 = vmatprep.subr.mxu0 0.0
    %1078 = vmatpush2.msra.mxu0 0.0
    %1079 = vmatprep.subr.mxu0 0.0
    %1080 = vmatpush2.msra.mxu0 0.0
    %1081 = vmatprep.subr.mxu0 0.0
    %1082 = vmatpush2.msra.mxu0 0.0
    %1083 = vmatprep.subr.mxu0 0.0
    %1084 = vmatpush2.msra.mxu0 0.0
    %1085 = vmatprep.mubr.f32.mxu0 0.0
    %1086 = vmatmul.mubr.f32.gmra.mxu0 %v1019
    %v1087 = vpop.f32.mrf.mxu0
    %v1088 = vadd.f32 %v191, %v1087
    %v1089 = vpop.f32.mrf.mxu0
    %v1090 = vadd.f32 %v195, %v1089
    %1091 = vdwg.mxu0
    %v1092 = vadd.f32 %v1088, %v166
    %v1093 = vxor.u32 %v1092, 2147483648
    %v1094 = vmul.f32 %v1093, 1.442695
    %v1095 = vpow.pop %v1094
    %v1096 = vadd.f32 %v1095, 1.0
    %v1097 = vrcp.pop %v1096
    %v1098 = vmul.f32 1.0, %v1097
    %v1099 = vtanh.pop %v1092
    %v1100 = vmul.f32 %v1098, %v978
    %1102 = vrot.lane.b32.xlu0 %v1099, 64
    %v1103 = vpop.permute.xlu0 %1102
    %v1105 = vmul.f32 %v1098, %v1103
    %1107 = vrot.lane.b32.xlu0 %v1105, 32
    %v1108 = vpop.permute.xlu0 %1107
    %v1110 = vadd.f32 %v1100, %v1108
    %v1111 = vtanh.pop %v1110
    %1113 = vrot.lane.b32.xlu0 %v1111, 64
    %v1114 = vpop.permute.xlu0 %1113
    %v1116 = vmul.f32 %v1098, %v1114
    %v1117 = vxor.u32 %v1090, 2147483648
    %v1118 = vmul.f32 %v1117, 1.442695
    %v1119 = vpow.pop %v1118
    %v1120 = vadd.f32 %v1119, 1.0
    %v1121 = vrcp.pop %v1120
    %v1122 = vmul.f32 1.0, %v1121
    %v1123 = vtanh.pop %v1090
    %v1124 = vmul.f32 %v1122, %v1002
    %1126 = vrot.lane.b32.xlu0 %v1123, 64
    %v1127 = vpop.permute.xlu0 %1126
    %v1129 = vmul.f32 %v1122, %v1127
    %1131 = vrot.lane.b32.xlu0 %v1129, 32
    %v1132 = vpop.permute.xlu0 %1131
    %v1134 = vadd.f32 %v1124, %v1132
    %v1135 = vtanh.pop %v1134
    %1137 = vrot.lane.b32.xlu0 %v1135, 64
    %v1138 = vpop.permute.xlu0 %1137
    %v1140 = vmul.f32 %v1122, %v1138
    %1142 = vrot.lane.b32.xlu0 %v1116, 32
    %v1143 = vpop.permute.xlu0 %1142
    %1146 = vrot.lane.b32.xlu0 %v1140, 64
    %v1147 = vpop.permute.xlu0 %1146
    %v1149 = vsel %vm221, %v1143, %v1147
    %v1151 = vsel %vm223, %v1149, 0
    %1153 = vmatprep.subr.mxu0 0.0
    %1154 = vmatpush1.msra.mxu0 0.0
    %1155 = vmatprep.subr.mxu0 0.0
    %1156 = vmatpush1.msra.mxu0 0.0
    %1157 = vmatprep.subr.mxu0 0.0
    %1158 = vmatpush1.msra.mxu0 0.0
    %1159 = vmatprep.subr.mxu0 0.0
    %1160 = vmatpush1.msra.mxu0 0.0
    %1161 = vmatprep.subr.mxu0 0.0
    %1162 = vmatpush1.msra.mxu0 0.0
    %1163 = vmatprep.subr.mxu0 0.0
    %1164 = vmatpush1.msra.mxu0 0.0
    %1165 = vmatprep.subr.mxu0 0.0
    %1166 = vmatpush1.msra.mxu0 0.0
    %1167 = vmatprep.subr.mxu0 0.0
    %1168 = vmatpush1.msra.mxu0 0.0
    %1169 = vmatprep.subr.mxu0 %v184
    %1170 = vmatpush1.msra.mxu0 %v183
    %1171 = vmatprep.subr.mxu0 %v182
    %1172 = vmatpush1.msra.mxu0 %v181
    %1173 = vmatprep.subr.mxu0 %v180
    %1174 = vmatpush1.msra.mxu0 %v179
    %1175 = vmatprep.subr.mxu0 %v178
    %1176 = vmatpush1.msra.mxu0 %v177
    %1177 = vmatprep.subr.mxu0 %v176
    %1178 = vmatpush1.msra.mxu0 %v175
    %1179 = vmatprep.subr.mxu0 %v174
    %1180 = vmatpush1.msra.mxu0 %v173
    %1181 = vmatprep.subr.mxu0 %v172
    %1182 = vmatpush1.msra.mxu0 %v171
    %1183 = vmatprep.subr.mxu0 %v170
    %1184 = vmatpush1.msra.mxu0 %v169
    %1185 = vmatprep.subr.mxu0 0.0
    %1186 = vmatpush2.msra.mxu0 0.0
    %1187 = vmatprep.subr.mxu0 0.0
    %1188 = vmatpush2.msra.mxu0 0.0
    %1189 = vmatprep.subr.mxu0 0.0
    %1190 = vmatpush2.msra.mxu0 0.0
    %1191 = vmatprep.subr.mxu0 0.0
    %1192 = vmatpush2.msra.mxu0 0.0
    %1193 = vmatprep.subr.mxu0 0.0
    %1194 = vmatpush2.msra.mxu0 0.0
    %1195 = vmatprep.subr.mxu0 0.0
    %1196 = vmatpush2.msra.mxu0 0.0
    %1197 = vmatprep.subr.mxu0 0.0
    %1198 = vmatpush2.msra.mxu0 0.0
    %1199 = vmatprep.subr.mxu0 0.0
    %1200 = vmatpush2.msra.mxu0 0.0
    %1201 = vmatprep.subr.mxu0 0.0
    %1202 = vmatpush2.msra.mxu0 0.0
    %1203 = vmatprep.subr.mxu0 0.0
    %1204 = vmatpush2.msra.mxu0 0.0
    %1205 = vmatprep.subr.mxu0 0.0
    %1206 = vmatpush2.msra.mxu0 0.0
    %1207 = vmatprep.subr.mxu0 0.0
    %1208 = vmatpush2.msra.mxu0 0.0
    %1209 = vmatprep.subr.mxu0 0.0
    %1210 = vmatpush2.msra.mxu0 0.0
    %1211 = vmatprep.subr.mxu0 0.0
    %1212 = vmatpush2.msra.mxu0 0.0
    %1213 = vmatprep.subr.mxu0 0.0
    %1214 = vmatpush2.msra.mxu0 0.0
    %1215 = vmatprep.subr.mxu0 0.0
    %1216 = vmatpush2.msra.mxu0 0.0
    %1217 = vmatprep.mubr.f32.mxu0 0.0
    %1218 = vmatmul.mubr.f32.gmra.mxu0 %v1151
    %v1219 = vpop.f32.mrf.mxu0
    %v1220 = vpop.f32.mrf.mxu0
    %v1221 = vadd.f32 %v195, %v1220
    %1222 = vdwg.mxu0
    %v1223 = vxor.u32 %v1221, 2147483648
    %v1224 = vmul.f32 %v1223, 1.442695
    %v1225 = vpow.pop %v1224
    %v1226 = vadd.f32 %v1225, 1.0
    %v1227 = vrcp.pop %v1226
    %v1228 = vmul.f32 1.0, %v1227
    %v1229 = vtanh.pop %v1221
    %v1230 = vmul.f32 %v1228, %v1134
    %1232 = vrot.lane.b32.xlu0 %v1229, 64
    %v1233 = vpop.permute.xlu0 %1232
    %v1235 = vmul.f32 %v1228, %v1233
    %1237 = vrot.lane.b32.xlu0 %v1235, 32
    %v1238 = vpop.permute.xlu0 %1237
    %v1240 = vadd.f32 %v1230, %v1238
    %v1241 = vtanh.pop %v1240
    %1243 = vrot.lane.b32.xlu0 %v1241, 64
    %v1244 = vpop.permute.xlu0 %1243
    %v1246 = vmul.f32 %v1228, %v1244
    %v1247 = vld [vmem:[#allocation2 + $0xa0] sm:$0xff]
    %v1248 = vld [vmem:[#allocation2 + $0xb0] sm:$0xff]
    %v1249 = vld [vmem:[#allocation2 + $0xc0] sm:$0xff]
    %v1250 = vld [vmem:[#allocation2 + $0xd0] sm:$0xff]
    %v1251 = vld [vmem:[#allocation2 + $0xe0] ss:$0 sm:$0xff]
    %1253 = vrot.lane.b32.xlu0 %v1246, 32
    %v1254 = vpop.permute.xlu0 %1253
    %v1255 = vsel %vm221, %v1254, 0
    %1257 = vmatprep.subr.mxu0 0.0
    %1258 = vmatpush1.msra.mxu0 0.0
    %1259 = vmatprep.subr.mxu0 0.0
    %1260 = vmatpush1.msra.mxu0 0.0
    %1261 = vmatprep.subr.mxu0 0.0
    %1262 = vmatpush1.msra.mxu0 0.0
    %1263 = vmatprep.subr.mxu0 0.0
    %1264 = vmatpush1.msra.mxu0 0.0
    %1265 = vmatprep.subr.mxu0 0.0
    %1266 = vmatpush1.msra.mxu0 0.0
    %1267 = vmatprep.subr.mxu0 0.0
    %1268 = vmatpush1.msra.mxu0 0.0
    %1269 = vmatprep.subr.mxu0 0.0
    %1270 = vmatpush1.msra.mxu0 0.0
    %1271 = vmatprep.subr.mxu0 0.0
    %1272 = vmatpush1.msra.mxu0 0.0
    %1273 = vmatprep.subr.mxu0 0.0
    %1274 = vmatpush1.msra.mxu0 0.0
    %1275 = vmatprep.subr.mxu0 0.0
    %1276 = vmatpush1.msra.mxu0 0.0
    %1277 = vmatprep.subr.mxu0 0.0
    %1278 = vmatpush1.msra.mxu0 0.0
    %1279 = vmatprep.subr.mxu0 0.0
    %1280 = vmatpush1.msra.mxu0 0.0
    %1281 = vmatprep.subr.mxu0 0.0
    %1282 = vmatpush1.msra.mxu0 %v1250
    %1283 = vmatprep.subr.mxu0 0.0
    %1284 = vmatpush1.msra.mxu0 %v1249
    %1285 = vmatprep.subr.mxu0 0.0
    %1286 = vmatpush1.msra.mxu0 %v1248
    %1287 = vmatprep.subr.mxu0 0.0
    %1288 = vmatpush1.msra.mxu0 %v1247
    %1289 = vmatprep.subr.mxu0 0.0
    %1290 = vmatpush2.msra.mxu0 0.0
    %1291 = vmatprep.subr.mxu0 0.0
    %1292 = vmatpush2.msra.mxu0 0.0
    %1293 = vmatprep.subr.mxu0 0.0
    %1294 = vmatpush2.msra.mxu0 0.0
    %1295 = vmatprep.subr.mxu0 0.0
    %1296 = vmatpush2.msra.mxu0 0.0
    %1297 = vmatprep.subr.mxu0 0.0
    %1298 = vmatpush2.msra.mxu0 0.0
    %1299 = vmatprep.subr.mxu0 0.0
    %1300 = vmatpush2.msra.mxu0 0.0
    %1301 = vmatprep.subr.mxu0 0.0
    %1302 = vmatpush2.msra.mxu0 0.0
    %1303 = vmatprep.subr.mxu0 0.0
    %1304 = vmatpush2.msra.mxu0 0.0
    %1305 = vmatprep.subr.mxu0 0.0
    %1306 = vmatpush2.msra.mxu0 0.0
    %1307 = vmatprep.subr.mxu0 0.0
    %1308 = vmatpush2.msra.mxu0 0.0
    %1309 = vmatprep.subr.mxu0 0.0
    %1310 = vmatpush2.msra.mxu0 0.0
    %1311 = vmatprep.subr.mxu0 0.0
    %1312 = vmatpush2.msra.mxu0 0.0
    %1313 = vmatprep.subr.mxu0 0.0
    %1314 = vmatpush2.msra.mxu0 0.0
    %1315 = vmatprep.subr.mxu0 0.0
    %1316 = vmatpush2.msra.mxu0 0.0
    %1317 = vmatprep.subr.mxu0 0.0
    %1318 = vmatpush2.msra.mxu0 0.0
    %1319 = vmatprep.subr.mxu0 0.0
    %1320 = vmatpush2.msra.mxu0 0.0
    %1321 = vmatprep.mubr.f32.mxu0 0.0
    %1322 = vmatmul.mubr.f32.gmra.mxu0 %v1255
    %v1323 = vpop.f32.mrf.mxu0
    %v1324 = vadd.f32 %v1251, %v1323
    %v1325 = vpop.f32.mrf.mxu0
    %1326 = vdwg.mxu0
    %vm1327 = vcmask 7168
    %1328 = vst.msk [vmem:[%s2] sm:$0xff] %vm1327, %v1324
    // Predicated region
    $region14: #{lstm_regression.1} parent=1 // pred_check
      _
    $region15: #{lstm_regression.1} parent=1 // pred_check_branch
      %1330 = sbr.rel (0) target = $region17
    $region16: #{lstm_regression.1} parent=1 // pred_region
      _
    $region17: #{lstm_regression.1} parent=1 // pred_fallthru
      _
    // Predicated region
    $region18: #{lstm_regression.1} parent=1 // pred_check
      _
    $region19: #{lstm_regression.1} parent=1 // pred_check_branch
      %1332 = sbr.rel (0) target = $region21
    $region20: #{lstm_regression.1} parent=1 // pred_region
      _
    $region21: #{lstm_regression.1} parent=1 // pred_fallthru
      _
    %1333 = vsyncpa [#allocation3], 1

</llo_original>
